<compile_context>
chip_gen: v7x
topology: tpu7x:2x2x1
jax: 0.10.0
libtpu: 0.0.40
codegen_flags: <defaults>
</compile_context>

<pallas_src>
import functools

import jax
import jax.numpy as jnp
from jax.experimental import pallas as pl
from jax.experimental.pallas import tpu as pltpu


def _inverted_residual_kernel(x_ref, w1_ref, b1_ref, wdw_ref, b2_ref,
                              w3_ref, b3_ref, rowm_ref, colm_ref, o_ref, *, W):
    # Layout: channels on sublanes, flattened pixels (H*W) on the lane axis.
    # x_ref:    (1, Cin, HW)    f32   one batch element (NCHW, HW flattened)
    # w1_ref:   (hidden, Cin)   bf16  1x1 expand weights (BN1 folded)
    # b1_ref:   (hidden, 1)     f32
    # wdw_ref:  (9, hidden, 1)  f32   3x3 depthwise taps, row = kh*3+kw (BN2 folded)
    # b2_ref:   (hidden, 1)     f32
    # w3_ref:   (Cout, hidden)  bf16  1x1 project weights (BN3 folded)
    # b3_ref:   (Cout, 1)       f32
    # rowm_ref: (3, HW)         f32   row-validity masks for kh = 0,1,2
    # colm_ref: (3, HW)         f32   col-validity masks for kw = 0,1,2
    # o_ref:    (1, Cout, HW)   f32
    hidden = w1_ref.shape[0]
    HW = x_ref.shape[2]

    x = x_ref[0]                                             # (Cin, HW) f32

    # ---- 1x1 expand conv + BN + ReLU (MXU, bf16 operands, f32 accumulate) ----
    # (With Cin=8 the MXU K-dim is under-filled; a VPU broadcast-FMA over the
    #  lane-dense layout is a possible alternative on v6e — kept on MXU here.)
    h1 = jnp.dot(w1_ref[...], x.astype(jnp.bfloat16),
                 preferred_element_type=jnp.float32)         # (hidden, HW)
    h1 = jnp.maximum(h1 + b1_ref[...], 0.0)

    # ---- 3x3 depthwise conv, stride 1, SAME + BN + ReLU ----------------------
    # Shifted windows via XLU lane rolls on the flattened pixel axis + edge
    # masks.  No padded VMEM scratch, no unaligned overlapping slice reads.
    rowm = rowm_ref[...]                                     # (3, HW), hoisted
    colm = colm_ref[...]                                     # (3, HW), hoisted
    taps = wdw_ref[...]                                      # (9, hidden, 1), hoisted

    acc = jnp.zeros((hidden, HW), jnp.float32)
    for kh in range(3):
        for kw in range(3):
            dy, dx = kh - 1, kw - 1
            off = dy * W + dx                                # source pixel offset
            shifted = h1 if off == 0 else pltpu.roll(h1, shift=(-off) % HW, axis=1)
            contrib = shifted * taps[kh * 3 + kw]            # per-channel tap
            if dy != 0 and dx != 0:
                contrib = contrib * (rowm[kh:kh + 1] * colm[kw:kw + 1])
            elif dy != 0:
                contrib = contrib * rowm[kh:kh + 1]
            elif dx != 0:
                contrib = contrib * colm[kw:kw + 1]
            acc = acc + contrib
    h2 = jnp.maximum(acc + b2_ref[...], 0.0)                 # (hidden, HW) f32

    # ---- 1x1 project conv + BN (MXU, bf16 operands, f32 accumulate) ----------
    y = jnp.dot(w3_ref[...], h2.astype(jnp.bfloat16),
                preferred_element_type=jnp.float32)          # (Cout, HW)
    y = y + b3_ref[...]

    # ---- residual add (f32), lane-dense store --------------------------------
    o_ref[0] = (x + y).astype(o_ref.dtype)


def inverted_residual(x_nchw, params):
    """x_nchw: (N, Cin, H, W) float32 -> (N, Cout, H, W) float32 (NCHW in/out)."""
    N, Cin, H, W = x_nchw.shape
    HW = H * W
    hidden = params["w1"].shape[0]
    Cout = params["w3"].shape[0]

    # NCHW -> (N, C, H*W) is a free row-major reshape (no transpose, no copy):
    # channels land on sublanes, pixels on the 128-wide lane axis.
    x = x_nchw.reshape(N, Cin, HW)

    # Edge-validity masks for the 3x3 depthwise taps (tiny constants).
    pix = jnp.arange(HW, dtype=jnp.int32)
    row, col = pix // W, pix % W
    ones = jnp.ones((HW,), jnp.float32)
    row_mask = jnp.stack([(row >= 1).astype(jnp.float32), ones,
                          (row <= H - 2).astype(jnp.float32)])
    col_mask = jnp.stack([(col >= 1).astype(jnp.float32), ones,
                          (col <= W - 2).astype(jnp.float32)])

    kernel = functools.partial(_inverted_residual_kernel, W=W)
    out = pl.pallas_call(
        kernel,
        out_shape=jax.ShapeDtypeStruct((N, Cout, HW), jnp.float32),
        grid_spec=pltpu.PrefetchScalarGridSpec(
            num_scalar_prefetch=0,
            grid=(N,),
            in_specs=[
                pl.BlockSpec((1, Cin, HW), lambda n: (n, 0, 0)),
                pl.BlockSpec((hidden, Cin), lambda n: (0, 0)),
                pl.BlockSpec((hidden, 1), lambda n: (0, 0)),
                pl.BlockSpec((9, hidden, 1), lambda n: (0, 0, 0)),
                pl.BlockSpec((hidden, 1), lambda n: (0, 0)),
                pl.BlockSpec((Cout, hidden), lambda n: (0, 0)),
                pl.BlockSpec((Cout, 1), lambda n: (0, 0)),
                pl.BlockSpec((3, HW), lambda n: (0, 0)),
                pl.BlockSpec((3, HW), lambda n: (0, 0)),
            ],
            out_specs=pl.BlockSpec((1, Cout, HW), lambda n: (n, 0, 0)),
        ),
        compiler_params=pltpu.CompilerParams(
            dimension_semantics=("parallel",)),
    )(x, params["w1"], params["b1"], params["wdw"], params["b2"],
      params["w3"], params["b3"], row_mask, col_mask)

    return out.reshape(N, Cout, H, W)


def make_params(key, in_channels, out_channels, expand_ratio):
    """Synthetic weights with eval-mode BatchNorm folded in.

    Shapes match the channels-on-sublanes kernel layout:
      w1  : (hidden, Cin)   bf16   conv1 1x1 expand   (BN1 folded)
      b1  : (hidden, 1)     f32
      wdw : (9, hidden, 1)  f32    conv2 3x3 depthwise, row = kh*3+kw (BN2 folded)
      b2  : (hidden, 1)     f32
      w3  : (Cout, hidden)  bf16   conv3 1x1 project  (BN3 folded)
      b3  : (Cout, 1)       f32
    """
    hidden = round(in_channels * expand_ratio)
    eps = 1e-5
    kw1, kdw, kw3, kb1, kb2, kb3 = jax.random.split(key, 6)

    def bn_fold(k, c):
        kg, kb, km, kv = jax.random.split(k, 4)
        gamma = 1.0 + 0.1 * jax.random.normal(kg, (c,), jnp.float32)
        beta = 0.1 * jax.random.normal(kb, (c,), jnp.float32)
        mean = 0.1 * jax.random.normal(km, (c,), jnp.float32)
        var = jnp.abs(jax.random.normal(kv, (c,), jnp.float32)) + 0.5
        scale = gamma / jnp.sqrt(var + eps)
        return scale, beta - mean * scale

    w1 = 0.2 * jax.random.normal(kw1, (hidden, in_channels), jnp.float32)
    s1, b1 = bn_fold(kb1, hidden)
    wdw = 0.2 * jax.random.normal(kdw, (9, hidden), jnp.float32)
    s2, b2 = bn_fold(kb2, hidden)
    w3 = 0.2 * jax.random.normal(kw3, (out_channels, hidden), jnp.float32)
    s3, b3 = bn_fold(kb3, out_channels)

    return {
        "w1": (w1 * s1[:, None]).astype(jnp.bfloat16),
        "b1": b1[:, None],
        "wdw": (wdw * s2[None, :])[:, :, None],
        "b2": b2[:, None],
        "w3": (w3 * s3[:, None]).astype(jnp.bfloat16),
        "b3": b3[:, None],
    }


def reference(x, params):
    """Pure-JAX NCHW reference mirroring the kernel's bf16 matmul-operand casts
    (f32 accumulation, f32 depthwise / bias / ReLU / residual)."""
    N, Cin, H, W = x.shape
    hidden = params["b1"].shape[0]
    Cout = params["b3"].shape[0]

    h = jnp.einsum("dc,nchw->ndhw", params["w1"], x.astype(jnp.bfloat16),
                   preferred_element_type=jnp.float32)
    h = jnp.maximum(h + params["b1"].reshape(1, hidden, 1, 1), 0.0)

    hp = jnp.pad(h, ((0, 0), (0, 0), (1, 1), (1, 1)))
    acc = jnp.zeros_like(h)
    for kh in range(3):
        for kw in range(3):
            tap = params["wdw"][kh * 3 + kw, :, 0].reshape(1, hidden, 1, 1)
            acc = acc + hp[:, :, kh:kh + H, kw:kw + W] * tap
    h2 = jnp.maximum(acc + params["b2"].reshape(1, hidden, 1, 1), 0.0)

    y = jnp.einsum("oc,nchw->nohw", params["w3"], h2.astype(jnp.bfloat16),
                   preferred_element_type=jnp.float32)
    y = y + params["b3"].reshape(1, Cout, 1, 1)
    return x + y


if __name__ == "__main__":
    # Small shapes consistent with the module:
    # batch=2, in_channels=out_channels=8, H=W=16, stride=1, expand_ratio=4
    N, C, H, W = 2, 8, 16, 16
    expand_ratio = 4

    key = jax.random.PRNGKey(0)
    kx, kp = jax.random.split(key)
    x = jax.random.normal(kx, (N, C, H, W), jnp.float32)
    params = make_params(kp, C, C, expand_ratio)

    out = jax.block_until_ready(inverted_residual(x, params))
    ref = reference(x, params)

    assert out.shape == (N, C, H, W)
    err = jnp.abs(out - ref)
    max_err = float(jnp.max(err))
    mean_err = float(jnp.mean(err))
    # Both sides use bf16 matmul operands with f32 accumulation; the only
    # expected divergence is f32 summation order plus (rarely) a one-ulp bf16
    # re-rounding of the h2 intermediate near a tie, hence split max/mean bounds.
    assert max_err < 5e-2, ("max abs err", max_err)
    assert mean_err < 1e-3, ("mean abs err", mean_err)

    print("KERNEL_OK")
</pallas_src>

<mosaic_0001>
module attributes {stable_mosaic.version = 11 : i64} {
  func.func @_inverted_residual_kernel(%arg0: i32, %arg1: memref<1x8x256xf32, #tpu.memory_space<vmem>>, %arg2: memref<32x8xbf16, #tpu.memory_space<vmem>>, %arg3: memref<32x1xf32, #tpu.memory_space<vmem>>, %arg4: memref<9x32x1xf32, #tpu.memory_space<vmem>>, %arg5: memref<32x1xf32, #tpu.memory_space<vmem>>, %arg6: memref<8x32xbf16, #tpu.memory_space<vmem>>, %arg7: memref<8x1xf32, #tpu.memory_space<vmem>>, %arg8: memref<3x256xf32, #tpu.memory_space<vmem>>, %arg9: memref<3x256xf32, #tpu.memory_space<vmem>>, %arg10: memref<1x8x256xf32, #tpu.memory_space<vmem>>) attributes {dimension_semantics = [#tpu.dimension_semantics<parallel>], iteration_bounds = array<i64: 2>, scalar_prefetch = 0 : i64, scratch_operands = 0 : i64, tpu.core_type = #tpu.core_type<tc>, window_params = [{transform_indices = @transform_0, window_bounds = array<i64: 1, 8, 256>}, {pipeline_mode = #tpu.pipeline_mode<synchronous>, transform_indices = @transform_1, window_bounds = array<i64: 32, 8>}, {pipeline_mode = #tpu.pipeline_mode<synchronous>, transform_indices = @transform_2, window_bounds = array<i64: 32, 1>}, {pipeline_mode = #tpu.pipeline_mode<synchronous>, transform_indices = @transform_3, window_bounds = array<i64: 9, 32, 1>}, {pipeline_mode = #tpu.pipeline_mode<synchronous>, transform_indices = @transform_4, window_bounds = array<i64: 32, 1>}, {pipeline_mode = #tpu.pipeline_mode<synchronous>, transform_indices = @transform_5, window_bounds = array<i64: 8, 32>}, {pipeline_mode = #tpu.pipeline_mode<synchronous>, transform_indices = @transform_6, window_bounds = array<i64: 8, 1>}, {pipeline_mode = #tpu.pipeline_mode<synchronous>, transform_indices = @transform_7, window_bounds = array<i64: 3, 256>}, {pipeline_mode = #tpu.pipeline_mode<synchronous>, transform_indices = @transform_8, window_bounds = array<i64: 3, 256>}, {transform_indices = @transform_9, window_bounds = array<i64: 1, 8, 256>}]} {
    %c0 = arith.constant 0 : index
    %c0_0 = arith.constant 0 : index
    %c0_1 = arith.constant 0 : index
    %0 = vector.load %arg1[%c0, %c0_0, %c0_1] : memref<1x8x256xf32, #tpu.memory_space<vmem>>, vector<1x8x256xf32>
    %1 = vector.shape_cast %0 : vector<1x8x256xf32> to vector<8x256xf32>
    %c0_2 = arith.constant 0 : index
    %c0_3 = arith.constant 0 : index
    %2 = vector.load %arg2[%c0_2, %c0_3] : memref<32x8xbf16, #tpu.memory_space<vmem>>, vector<32x8xbf16>
    %3 = arith.truncf %1 : vector<8x256xf32> to vector<8x256xbf16>
    %cst = arith.constant dense<0.000000e+00> : vector<32x256xf32>
    %4 = tpu.matmul %2, %3, %cst {dimension_numbers = #tpu.dot_dimension_numbers<[1], [0], [0], [1], [0, 0, 1, 1], [], []>} : vector<32x8xbf16>, vector<8x256xbf16>, vector<32x256xf32> -> vector<32x256xf32>
    %c0_4 = arith.constant 0 : index
    %c0_5 = arith.constant 0 : index
    %5 = vector.load %arg3[%c0_4, %c0_5] : memref<32x1xf32, #tpu.memory_space<vmem>>, vector<32x1xf32>
    %6 = vector.broadcast %5 : vector<32x1xf32> to vector<32x256xf32>
    %7 = arith.addf %4, %6 : vector<32x256xf32>
    %cst_6 = arith.constant 0.000000e+00 : f32
    %8 = vector.broadcast %cst_6 : f32 to vector<32x256xf32>
    %9 = arith.maximumf %7, %8 : vector<32x256xf32>
    %c0_7 = arith.constant 0 : index
    %c0_8 = arith.constant 0 : index
    %10 = vector.load %arg8[%c0_7, %c0_8] : memref<3x256xf32, #tpu.memory_space<vmem>>, vector<3x256xf32>
    %c0_9 = arith.constant 0 : index
    %c0_10 = arith.constant 0 : index
    %11 = vector.load %arg9[%c0_9, %c0_10] : memref<3x256xf32, #tpu.memory_space<vmem>>, vector<3x256xf32>
    %c0_11 = arith.constant 0 : index
    %c0_12 = arith.constant 0 : index
    %c0_13 = arith.constant 0 : index
    %12 = vector.load %arg4[%c0_11, %c0_12, %c0_13] : memref<9x32x1xf32, #tpu.memory_space<vmem>>, vector<9x32x1xf32>
    %cst_14 = arith.constant 0.000000e+00 : f32
    %13 = vector.broadcast %cst_14 : f32 to vector<32x256xf32>
    %c17_i32 = arith.constant 17 : i32
    %14 = tpu.dynamic_rotate %9 by %c17_i32 dim 1 : vector<32x256xf32>, i32 -> vector<32x256xf32>
    %15 = vector.extract_strided_slice %12 {offsets = [0, 0, 0], sizes = [1, 32, 1], strides = [1, 1, 1]} : vector<9x32x1xf32> to vector<1x32x1xf32>
    %16 = vector.shape_cast %15 : vector<1x32x1xf32> to vector<32x1xf32>
    %17 = vector.broadcast %16 : vector<32x1xf32> to vector<32x256xf32>
    %18 = arith.mulf %14, %17 : vector<32x256xf32>
    %19 = vector.extract_strided_slice %10 {offsets = [0, 0], sizes = [1, 256], strides = [1, 1]} : vector<3x256xf32> to vector<1x256xf32>
    %20 = vector.extract_strided_slice %11 {offsets = [0, 0], sizes = [1, 256], strides = [1, 1]} : vector<3x256xf32> to vector<1x256xf32>
    %21 = arith.mulf %19, %20 : vector<1x256xf32>
    %22 = vector.broadcast %21 : vector<1x256xf32> to vector<32x256xf32>
    %23 = arith.mulf %18, %22 : vector<32x256xf32>
    %24 = arith.addf %13, %23 : vector<32x256xf32>
    %c16_i32 = arith.constant 16 : i32
    %25 = tpu.dynamic_rotate %9 by %c16_i32 dim 1 : vector<32x256xf32>, i32 -> vector<32x256xf32>
    %26 = vector.extract_strided_slice %12 {offsets = [1, 0, 0], sizes = [1, 32, 1], strides = [1, 1, 1]} : vector<9x32x1xf32> to vector<1x32x1xf32>
    %27 = vector.shape_cast %26 : vector<1x32x1xf32> to vector<32x1xf32>
    %28 = vector.broadcast %27 : vector<32x1xf32> to vector<32x256xf32>
    %29 = arith.mulf %25, %28 : vector<32x256xf32>
    %30 = vector.extract_strided_slice %10 {offsets = [0, 0], sizes = [1, 256], strides = [1, 1]} : vector<3x256xf32> to vector<1x256xf32>
    %31 = vector.broadcast %30 : vector<1x256xf32> to vector<32x256xf32>
    %32 = arith.mulf %29, %31 : vector<32x256xf32>
    %33 = arith.addf %24, %32 : vector<32x256xf32>
    %c15_i32 = arith.constant 15 : i32
    %34 = tpu.dynamic_rotate %9 by %c15_i32 dim 1 : vector<32x256xf32>, i32 -> vector<32x256xf32>
    %35 = vector.extract_strided_slice %12 {offsets = [2, 0, 0], sizes = [1, 32, 1], strides = [1, 1, 1]} : vector<9x32x1xf32> to vector<1x32x1xf32>
    %36 = vector.shape_cast %35 : vector<1x32x1xf32> to vector<32x1xf32>
    %37 = vector.broadcast %36 : vector<32x1xf32> to vector<32x256xf32>
    %38 = arith.mulf %34, %37 : vector<32x256xf32>
    %39 = vector.extract_strided_slice %10 {offsets = [0, 0], sizes = [1, 256], strides = [1, 1]} : vector<3x256xf32> to vector<1x256xf32>
    %40 = vector.extract_strided_slice %11 {offsets = [2, 0], sizes = [1, 256], strides = [1, 1]} : vector<3x256xf32> to vector<1x256xf32>
    %41 = arith.mulf %39, %40 : vector<1x256xf32>
    %42 = vector.broadcast %41 : vector<1x256xf32> to vector<32x256xf32>
    %43 = arith.mulf %38, %42 : vector<32x256xf32>
    %44 = arith.addf %33, %43 : vector<32x256xf32>
    %c1_i32 = arith.constant 1 : i32
    %45 = tpu.dynamic_rotate %9 by %c1_i32 dim 1 : vector<32x256xf32>, i32 -> vector<32x256xf32>
    %46 = vector.extract_strided_slice %12 {offsets = [3, 0, 0], sizes = [1, 32, 1], strides = [1, 1, 1]} : vector<9x32x1xf32> to vector<1x32x1xf32>
    %47 = vector.shape_cast %46 : vector<1x32x1xf32> to vector<32x1xf32>
    %48 = vector.broadcast %47 : vector<32x1xf32> to vector<32x256xf32>
    %49 = arith.mulf %45, %48 : vector<32x256xf32>
    %50 = vector.extract_strided_slice %11 {offsets = [0, 0], sizes = [1, 256], strides = [1, 1]} : vector<3x256xf32> to vector<1x256xf32>
    %51 = vector.broadcast %50 : vector<1x256xf32> to vector<32x256xf32>
    %52 = arith.mulf %49, %51 : vector<32x256xf32>
    %53 = arith.addf %44, %52 : vector<32x256xf32>
    %54 = vector.extract_strided_slice %12 {offsets = [4, 0, 0], sizes = [1, 32, 1], strides = [1, 1, 1]} : vector<9x32x1xf32> to vector<1x32x1xf32>
    %55 = vector.shape_cast %54 : vector<1x32x1xf32> to vector<32x1xf32>
    %56 = vector.broadcast %55 : vector<32x1xf32> to vector<32x256xf32>
    %57 = arith.mulf %9, %56 : vector<32x256xf32>
    %58 = arith.addf %53, %57 : vector<32x256xf32>
    %c255_i32 = arith.constant 255 : i32
    %59 = tpu.dynamic_rotate %9 by %c255_i32 dim 1 : vector<32x256xf32>, i32 -> vector<32x256xf32>
    %60 = vector.extract_strided_slice %12 {offsets = [5, 0, 0], sizes = [1, 32, 1], strides = [1, 1, 1]} : vector<9x32x1xf32> to vector<1x32x1xf32>
    %61 = vector.shape_cast %60 : vector<1x32x1xf32> to vector<32x1xf32>
    %62 = vector.broadcast %61 : vector<32x1xf32> to vector<32x256xf32>
    %63 = arith.mulf %59, %62 : vector<32x256xf32>
    %64 = vector.extract_strided_slice %11 {offsets = [2, 0], sizes = [1, 256], strides = [1, 1]} : vector<3x256xf32> to vector<1x256xf32>
    %65 = vector.broadcast %64 : vector<1x256xf32> to vector<32x256xf32>
    %66 = arith.mulf %63, %65 : vector<32x256xf32>
    %67 = arith.addf %58, %66 : vector<32x256xf32>
    %c241_i32 = arith.constant 241 : i32
    %68 = tpu.dynamic_rotate %9 by %c241_i32 dim 1 : vector<32x256xf32>, i32 -> vector<32x256xf32>
    %69 = vector.extract_strided_slice %12 {offsets = [6, 0, 0], sizes = [1, 32, 1], strides = [1, 1, 1]} : vector<9x32x1xf32> to vector<1x32x1xf32>
    %70 = vector.shape_cast %69 : vector<1x32x1xf32> to vector<32x1xf32>
    %71 = vector.broadcast %70 : vector<32x1xf32> to vector<32x256xf32>
    %72 = arith.mulf %68, %71 : vector<32x256xf32>
    %73 = vector.extract_strided_slice %10 {offsets = [2, 0], sizes = [1, 256], strides = [1, 1]} : vector<3x256xf32> to vector<1x256xf32>
    %74 = vector.extract_strided_slice %11 {offsets = [0, 0], sizes = [1, 256], strides = [1, 1]} : vector<3x256xf32> to vector<1x256xf32>
    %75 = arith.mulf %73, %74 : vector<1x256xf32>
    %76 = vector.broadcast %75 : vector<1x256xf32> to vector<32x256xf32>
    %77 = arith.mulf %72, %76 : vector<32x256xf32>
    %78 = arith.addf %67, %77 : vector<32x256xf32>
    %c240_i32 = arith.constant 240 : i32
    %79 = tpu.dynamic_rotate %9 by %c240_i32 dim 1 : vector<32x256xf32>, i32 -> vector<32x256xf32>
    %80 = vector.extract_strided_slice %12 {offsets = [7, 0, 0], sizes = [1, 32, 1], strides = [1, 1, 1]} : vector<9x32x1xf32> to vector<1x32x1xf32>
    %81 = vector.shape_cast %80 : vector<1x32x1xf32> to vector<32x1xf32>
    %82 = vector.broadcast %81 : vector<32x1xf32> to vector<32x256xf32>
    %83 = arith.mulf %79, %82 : vector<32x256xf32>
    %84 = vector.extract_strided_slice %10 {offsets = [2, 0], sizes = [1, 256], strides = [1, 1]} : vector<3x256xf32> to vector<1x256xf32>
    %85 = vector.broadcast %84 : vector<1x256xf32> to vector<32x256xf32>
    %86 = arith.mulf %83, %85 : vector<32x256xf32>
    %87 = arith.addf %78, %86 : vector<32x256xf32>
    %c239_i32 = arith.constant 239 : i32
    %88 = tpu.dynamic_rotate %9 by %c239_i32 dim 1 : vector<32x256xf32>, i32 -> vector<32x256xf32>
    %89 = vector.extract_strided_slice %12 {offsets = [8, 0, 0], sizes = [1, 32, 1], strides = [1, 1, 1]} : vector<9x32x1xf32> to vector<1x32x1xf32>
    %90 = vector.shape_cast %89 : vector<1x32x1xf32> to vector<32x1xf32>
    %91 = vector.broadcast %90 : vector<32x1xf32> to vector<32x256xf32>
    %92 = arith.mulf %88, %91 : vector<32x256xf32>
    %93 = vector.extract_strided_slice %10 {offsets = [2, 0], sizes = [1, 256], strides = [1, 1]} : vector<3x256xf32> to vector<1x256xf32>
    %94 = vector.extract_strided_slice %11 {offsets = [2, 0], sizes = [1, 256], strides = [1, 1]} : vector<3x256xf32> to vector<1x256xf32>
    %95 = arith.mulf %93, %94 : vector<1x256xf32>
    %96 = vector.broadcast %95 : vector<1x256xf32> to vector<32x256xf32>
    %97 = arith.mulf %92, %96 : vector<32x256xf32>
    %98 = arith.addf %87, %97 : vector<32x256xf32>
    %c0_15 = arith.constant 0 : index
    %c0_16 = arith.constant 0 : index
    %99 = vector.load %arg5[%c0_15, %c0_16] : memref<32x1xf32, #tpu.memory_space<vmem>>, vector<32x1xf32>
    %100 = vector.broadcast %99 : vector<32x1xf32> to vector<32x256xf32>
    %101 = arith.addf %98, %100 : vector<32x256xf32>
    %cst_17 = arith.constant 0.000000e+00 : f32
    %102 = vector.broadcast %cst_17 : f32 to vector<32x256xf32>
    %103 = arith.maximumf %101, %102 : vector<32x256xf32>
    %c0_18 = arith.constant 0 : index
    %c0_19 = arith.constant 0 : index
    %104 = vector.load %arg6[%c0_18, %c0_19] : memref<8x32xbf16, #tpu.memory_space<vmem>>, vector<8x32xbf16>
    %105 = arith.truncf %103 : vector<32x256xf32> to vector<32x256xbf16>
    %cst_20 = arith.constant dense<0.000000e+00> : vector<8x256xf32>
    %106 = tpu.matmul %104, %105, %cst_20 {dimension_numbers = #tpu.dot_dimension_numbers<[1], [0], [0], [1], [0, 0, 1, 1], [], []>} : vector<8x32xbf16>, vector<32x256xbf16>, vector<8x256xf32> -> vector<8x256xf32>
    %c0_21 = arith.constant 0 : index
    %c0_22 = arith.constant 0 : index
    %107 = vector.load %arg7[%c0_21, %c0_22] : memref<8x1xf32, #tpu.memory_space<vmem>>, vector<8x1xf32>
    %108 = vector.broadcast %107 : vector<8x1xf32> to vector<8x256xf32>
    %109 = arith.addf %106, %108 : vector<8x256xf32>
    %110 = arith.addf %1, %109 : vector<8x256xf32>
    %c0_23 = arith.constant 0 : index
    %c0_24 = arith.constant 0 : index
    %c0_25 = arith.constant 0 : index
    %111 = vector.load %arg10[%c0_23, %c0_24, %c0_25] : memref<1x8x256xf32, #tpu.memory_space<vmem>>, vector<1x8x256xf32>
    %112 = vector.shape_cast %111 : vector<1x8x256xf32> to vector<8x256xf32>
    %113 = vector.shape_cast %110 : vector<8x256xf32> to vector<1x8x256xf32>
    tpu.vector_store %arg10[%c0_23, %c0_24, %c0_25], %113 {strides = array<i32>} : memref<1x8x256xf32, #tpu.memory_space<vmem>>, vector<1x8x256xf32>,
    return
  }
  func.func @transform_0(%arg0: i32) -> (i32, i32, i32) {
    %c0_i32 = arith.constant 0 : i32
    %c0_i32_0 = arith.constant 0 : i32
    %c0_i32_1 = arith.constant 0 : i32
    return %arg0, %c0_i32, %c0_i32_0 : i32, i32, i32
  }
  func.func @transform_1(%arg0: i32) -> (i32, i32) {
    %c0_i32 = arith.constant 0 : i32
    %c0_i32_0 = arith.constant 0 : i32
    %c0_i32_1 = arith.constant 0 : i32
    return %c0_i32, %c0_i32_0 : i32, i32
  }
  func.func @transform_2(%arg0: i32) -> (i32, i32) {
    %c0_i32 = arith.constant 0 : i32
    %c0_i32_0 = arith.constant 0 : i32
    %c0_i32_1 = arith.constant 0 : i32
    return %c0_i32, %c0_i32_0 : i32, i32
  }
  func.func @transform_3(%arg0: i32) -> (i32, i32, i32) {
    %c0_i32 = arith.constant 0 : i32
    %c0_i32_0 = arith.constant 0 : i32
    %c0_i32_1 = arith.constant 0 : i32
    %c0_i32_2 = arith.constant 0 : i32
    return %c0_i32, %c0_i32_0, %c0_i32_1 : i32, i32, i32
  }
  func.func @transform_4(%arg0: i32) -> (i32, i32) {
    %c0_i32 = arith.constant 0 : i32
    %c0_i32_0 = arith.constant 0 : i32
    %c0_i32_1 = arith.constant 0 : i32
    return %c0_i32, %c0_i32_0 : i32, i32
  }
  func.func @transform_5(%arg0: i32) -> (i32, i32) {
    %c0_i32 = arith.constant 0 : i32
    %c0_i32_0 = arith.constant 0 : i32
    %c0_i32_1 = arith.constant 0 : i32
    return %c0_i32, %c0_i32_0 : i32, i32
  }
  func.func @transform_6(%arg0: i32) -> (i32, i32) {
    %c0_i32 = arith.constant 0 : i32
    %c0_i32_0 = arith.constant 0 : i32
    %c0_i32_1 = arith.constant 0 : i32
    return %c0_i32, %c0_i32_0 : i32, i32
  }
  func.func @transform_7(%arg0: i32) -> (i32, i32) {
    %c0_i32 = arith.constant 0 : i32
    %c0_i32_0 = arith.constant 0 : i32
    %c0_i32_1 = arith.constant 0 : i32
    return %c0_i32, %c0_i32_0 : i32, i32
  }
  func.func @transform_8(%arg0: i32) -> (i32, i32) {
    %c0_i32 = arith.constant 0 : i32
    %c0_i32_0 = arith.constant 0 : i32
    %c0_i32_1 = arith.constant 0 : i32
    return %c0_i32, %c0_i32_0 : i32, i32
  }
  func.func @transform_9(%arg0: i32) -> (i32, i32, i32) {
    %c0_i32 = arith.constant 0 : i32
    %c0_i32_0 = arith.constant 0 : i32
    %c0_i32_1 = arith.constant 0 : i32
    return %arg0, %c0_i32, %c0_i32_0 : i32, i32, i32
  }
}

</mosaic_0001>

<llo_original>
// kernel: tpu_custom_call.1
$region0: #{tpu_custom_call.1}
  #allocation0 [shape = 'u32[]', space=smem, size = 0x4, offset = 0x4, fixed_abs, tag = 'smem constant byte address 0x4 - core index']
  #allocation1 [shape = 'u32[144,128]{1,0:T(1,128)}', space=vmem, size = 0x12000, scoped, tag = 'internal scratch']
  %s0 = inlined_call_operand.vmem [shape: f32[2,8,256], index: 0, kind: input, shape index: {}]
  %s1 = inlined_call_operand.vmem [shape: bf16[32,8], index: 1, kind: input, shape index: {}]
  %s2 = inlined_call_operand.vmem [shape: f32[32,1], index: 2, kind: input, shape index: {}]
  %s3 = inlined_call_operand.vmem [shape: f32[9,32,1], index: 3, kind: input, shape index: {}]
  %s4 = inlined_call_operand.vmem [shape: f32[32,1], index: 4, kind: input, shape index: {}]
  %s5 = inlined_call_operand.vmem [shape: bf16[8,32], index: 5, kind: input, shape index: {}]
  %s6 = inlined_call_operand.vmem [shape: f32[8,1], index: 6, kind: input, shape index: {}]
  %s7 = inlined_call_operand.vmem [shape: f32[3,256], index: 7, kind: input, shape index: {}]
  %s8 = inlined_call_operand.vmem [shape: f32[3,256], index: 8, kind: input, shape index: {}]
  %s9 = inlined_call_operand.hbm [shape: f32[2,8,256], index: 9, kind: output, shape index: {}]
  %s10 = sld [smem:[#allocation0]]
  $region69: #{tpu_custom_call.1} parent=0
    _
  %s12 = ssub.s32 1, %s10
  %s13 = scalar_select 0, %s12, %s10
  $region1: #{tpu_custom_call.1} parent=0
    #allocation2 [shape = 'u8[16384]{0}', space=vmem, size = 0x4000, scoped, tag = 'output window, operand 0']
    #allocation3 [shape = 's32[2]{0}', space=sflag, size = 0x8, scoped, tag = 'scoped memory for tpu_custom_call.1']
    %14 = vsyncpa [#allocation3], 0
    %s15 = scalar_lea.sflag [#allocation3], 1
    %16 = vsyncpa %s15, 0
    loop: start=0, step=1, limit=4
    $region2: #{tpu_custom_call.1} parent=1 // loop_pre_header
      _
    $region3: #{tpu_custom_call.1} parent=1 // loop_header
      %s18 = sphi 0, %s22
      %p19 = scmp.ge.s32.totalorder %s18, 4
      %s28 = sphi 0, %s30
      %s31 = sphi 0, %s28
      %s32 = sphi 0, %s31
      %s48 = sphi 0, %s32
      %s52 = sphi 0, %s52
      %s54 = sphi 0, %s52
      %s55 = sphi 0, %s54
      %s69 = sphi 0, %s55
      %s73 = sphi 0, %s73
      %s75 = sphi 0, %s73
      %s76 = sphi 0, %s75
      %s90 = sphi 0, %s76
      %s94 = sphi 0, %s94
      %s96 = sphi 0, %s94
      %s97 = sphi 0, %s96
      %s111 = sphi 0, %s97
      %s115 = sphi 0, %s115
      %s117 = sphi 0, %s115
      %s118 = sphi 0, %s117
      %s132 = sphi 0, %s118
      %s136 = sphi 0, %s136
      %s138 = sphi 0, %s136
      %s139 = sphi 0, %s138
      %s153 = sphi 0, %s139
      %s157 = sphi 0, %s157
      %s159 = sphi 0, %s157
      %s160 = sphi 0, %s159
      %s174 = sphi 0, %s160
      %s178 = sphi 0, %s178
      %s180 = sphi 0, %s178
      %s181 = sphi 0, %s180
      %s195 = sphi 0, %s181
      %s199 = sphi 0, %s199
      %s201 = sphi 0, %s199
      %s202 = sphi 0, %s201
      %s216 = sphi 0, %s202
      %s222 = sphi 0, %s224
      %s225 = sphi 0, %s222
      %s226 = sphi 0, %s225
      %s242 = sphi 0, %s226
    $region4: #{tpu_custom_call.1} parent=1 // loop_header_branch
      %21 = sbr.rel (%p19) target = $region8
    $region5: #{tpu_custom_call.1} parent=1 // loop_body
      %s23 = ssub.s32 %s18, 1
      %s24 = ssub.s32 %s18, 2
      %s25 = sadd.s32 %s18, 1
      %s26 = ssub.s32 %s18, %s25
      %p27 = scmp.eq.s32.totalorder %s26, 0
      %s29 = sadd.s32 %s28, 1
      %s30 = scalar_select %p27, %s28, %s29
      %p33 = pneg %p27
      %p34 = scmp.eq.s32.totalorder %s18, 1
      %p35 = por %p33, %p34
      %p36 = scmp.ne.s32.totalorder %s28, %s31
      %p37 = scmp.eq.s32.totalorder %s18, 0
      %p38 = por %p36, %p37
      %p39 = scmp.ne.s32.totalorder %s28, %s31
      %p40 = scmp.eq.s32.totalorder %s23, 1
      %p41 = por %p39, %p40
      %p42 = scmp.ne.s32.totalorder %s31, %s32
      %p43 = scmp.eq.s32.totalorder %s23, 0
      %p44 = por %p42, %p43
      %p45 = scmp.ne.s32.totalorder %s31, %s32
      %p46 = scmp.eq.s32.totalorder %s24, 1
      %p47 = por %p45, %p46
      %p49 = scmp.ne.s32.totalorder %s32, %s48
      %p50 = scmp.eq.s32.totalorder %s24, 0
      %p51 = por %p49, %p50
      %s53 = sadd.s32 %s52, 1
      %p56 = scmp.eq.s32.totalorder %s18, 1
      %p57 = scmp.ne.s32.totalorder %s52, %s54
      %p58 = scmp.eq.s32.totalorder %s18, 0
      %p59 = por %p57, %p58
      %p60 = scmp.ne.s32.totalorder %s52, %s54
      %p61 = scmp.eq.s32.totalorder %s23, 1
      %p62 = por %p60, %p61
      %p63 = scmp.ne.s32.totalorder %s54, %s55
      %p64 = scmp.eq.s32.totalorder %s23, 0
      %p65 = por %p63, %p64
      %p66 = scmp.ne.s32.totalorder %s54, %s55
      %p67 = scmp.eq.s32.totalorder %s24, 1
      %p68 = por %p66, %p67
      %p70 = scmp.ne.s32.totalorder %s55, %s69
      %p71 = scmp.eq.s32.totalorder %s24, 0
      %p72 = por %p70, %p71
      %s74 = sadd.s32 %s73, 1
      %p77 = scmp.eq.s32.totalorder %s18, 1
      %p78 = scmp.ne.s32.totalorder %s73, %s75
      %p79 = scmp.eq.s32.totalorder %s18, 0
      %p80 = por %p78, %p79
      %p81 = scmp.ne.s32.totalorder %s73, %s75
      %p82 = scmp.eq.s32.totalorder %s23, 1
      %p83 = por %p81, %p82
      %p84 = scmp.ne.s32.totalorder %s75, %s76
      %p85 = scmp.eq.s32.totalorder %s23, 0
      %p86 = por %p84, %p85
      %p87 = scmp.ne.s32.totalorder %s75, %s76
      %p88 = scmp.eq.s32.totalorder %s24, 1
      %p89 = por %p87, %p88
      %p91 = scmp.ne.s32.totalorder %s76, %s90
      %p92 = scmp.eq.s32.totalorder %s24, 0
      %p93 = por %p91, %p92
      %s95 = sadd.s32 %s94, 1
      %p98 = scmp.eq.s32.totalorder %s18, 1
      %p99 = scmp.ne.s32.totalorder %s94, %s96
      %p100 = scmp.eq.s32.totalorder %s18, 0
      %p101 = por %p99, %p100
      %p102 = scmp.ne.s32.totalorder %s94, %s96
      %p103 = scmp.eq.s32.totalorder %s23, 1
      %p104 = por %p102, %p103
      %p105 = scmp.ne.s32.totalorder %s96, %s97
      %p106 = scmp.eq.s32.totalorder %s23, 0
      %p107 = por %p105, %p106
      %p108 = scmp.ne.s32.totalorder %s96, %s97
      %p109 = scmp.eq.s32.totalorder %s24, 1
      %p110 = por %p108, %p109
      %p112 = scmp.ne.s32.totalorder %s97, %s111
      %p113 = scmp.eq.s32.totalorder %s24, 0
      %p114 = por %p112, %p113
      %s116 = sadd.s32 %s115, 1
      %p119 = scmp.eq.s32.totalorder %s18, 1
      %p120 = scmp.ne.s32.totalorder %s115, %s117
      %p121 = scmp.eq.s32.totalorder %s18, 0
      %p122 = por %p120, %p121
      %p123 = scmp.ne.s32.totalorder %s115, %s117
      %p124 = scmp.eq.s32.totalorder %s23, 1
      %p125 = por %p123, %p124
      %p126 = scmp.ne.s32.totalorder %s117, %s118
      %p127 = scmp.eq.s32.totalorder %s23, 0
      %p128 = por %p126, %p127
      %p129 = scmp.ne.s32.totalorder %s117, %s118
      %p130 = scmp.eq.s32.totalorder %s24, 1
      %p131 = por %p129, %p130
      %p133 = scmp.ne.s32.totalorder %s118, %s132
      %p134 = scmp.eq.s32.totalorder %s24, 0
      %p135 = por %p133, %p134
      %s137 = sadd.s32 %s136, 1
      %p140 = scmp.eq.s32.totalorder %s18, 1
      %p141 = scmp.ne.s32.totalorder %s136, %s138
      %p142 = scmp.eq.s32.totalorder %s18, 0
      %p143 = por %p141, %p142
      %p144 = scmp.ne.s32.totalorder %s136, %s138
      %p145 = scmp.eq.s32.totalorder %s23, 1
      %p146 = por %p144, %p145
      %p147 = scmp.ne.s32.totalorder %s138, %s139
      %p148 = scmp.eq.s32.totalorder %s23, 0
      %p149 = por %p147, %p148
      %p150 = scmp.ne.s32.totalorder %s138, %s139
      %p151 = scmp.eq.s32.totalorder %s24, 1
      %p152 = por %p150, %p151
      %p154 = scmp.ne.s32.totalorder %s139, %s153
      %p155 = scmp.eq.s32.totalorder %s24, 0
      %p156 = por %p154, %p155
      %s158 = sadd.s32 %s157, 1
      %p161 = scmp.eq.s32.totalorder %s18, 1
      %p162 = scmp.ne.s32.totalorder %s157, %s159
      %p163 = scmp.eq.s32.totalorder %s18, 0
      %p164 = por %p162, %p163
      %p165 = scmp.ne.s32.totalorder %s157, %s159
      %p166 = scmp.eq.s32.totalorder %s23, 1
      %p167 = por %p165, %p166
      %p168 = scmp.ne.s32.totalorder %s159, %s160
      %p169 = scmp.eq.s32.totalorder %s23, 0
      %p170 = por %p168, %p169
      %p171 = scmp.ne.s32.totalorder %s159, %s160
      %p172 = scmp.eq.s32.totalorder %s24, 1
      %p173 = por %p171, %p172
      %p175 = scmp.ne.s32.totalorder %s160, %s174
      %p176 = scmp.eq.s32.totalorder %s24, 0
      %p177 = por %p175, %p176
      %s179 = sadd.s32 %s178, 1
      %p182 = scmp.eq.s32.totalorder %s18, 1
      %p183 = scmp.ne.s32.totalorder %s178, %s180
      %p184 = scmp.eq.s32.totalorder %s18, 0
      %p185 = por %p183, %p184
      %p186 = scmp.ne.s32.totalorder %s178, %s180
      %p187 = scmp.eq.s32.totalorder %s23, 1
      %p188 = por %p186, %p187
      %p189 = scmp.ne.s32.totalorder %s180, %s181
      %p190 = scmp.eq.s32.totalorder %s23, 0
      %p191 = por %p189, %p190
      %p192 = scmp.ne.s32.totalorder %s180, %s181
      %p193 = scmp.eq.s32.totalorder %s24, 1
      %p194 = por %p192, %p193
      %p196 = scmp.ne.s32.totalorder %s181, %s195
      %p197 = scmp.eq.s32.totalorder %s24, 0
      %p198 = por %p196, %p197
      %s200 = sadd.s32 %s199, 1
      %p203 = scmp.eq.s32.totalorder %s18, 1
      %p204 = scmp.ne.s32.totalorder %s199, %s201
      %p205 = scmp.eq.s32.totalorder %s18, 0
      %p206 = por %p204, %p205
      %p207 = scmp.ne.s32.totalorder %s199, %s201
      %p208 = scmp.eq.s32.totalorder %s23, 1
      %p209 = por %p207, %p208
      %p210 = scmp.ne.s32.totalorder %s201, %s202
      %p211 = scmp.eq.s32.totalorder %s23, 0
      %p212 = por %p210, %p211
      %p213 = scmp.ne.s32.totalorder %s201, %s202
      %p214 = scmp.eq.s32.totalorder %s24, 1
      %p215 = por %p213, %p214
      %p217 = scmp.ne.s32.totalorder %s202, %s216
      %p218 = scmp.eq.s32.totalorder %s24, 0
      %p219 = por %p217, %p218
      %s220 = ssub.s32 %s18, %s25
      %p221 = scmp.eq.s32.totalorder %s220, 0
      %s223 = sadd.s32 %s222, 1
      %s224 = scalar_select %p221, %s222, %s223
      %p227 = pneg %p221
      %p228 = scmp.eq.s32.totalorder %s18, 1
      %p229 = por %p227, %p228
      %p230 = scmp.ne.s32.totalorder %s222, %s225
      %p231 = scmp.eq.s32.totalorder %s18, 0
      %p232 = por %p230, %p231
      %p233 = scmp.ne.s32.totalorder %s222, %s225
      %p234 = scmp.eq.s32.totalorder %s23, 1
      %p235 = por %p233, %p234
      %p236 = scmp.ne.s32.totalorder %s225, %s226
      %p237 = scmp.eq.s32.totalorder %s23, 0
      %p238 = por %p236, %p237
      %p239 = scmp.ne.s32.totalorder %s225, %s226
      %p240 = scmp.eq.s32.totalorder %s24, 1
      %p241 = por %p239, %p240
      %p243 = scmp.ne.s32.totalorder %s226, %s242
      %p244 = scmp.eq.s32.totalorder %s24, 0
      %p245 = por %p243, %p244
      %p246 = scmp.le.s32.totalorder 1, %s18
      %p247 = scmp.lt.s32.totalorder %s18, 3
      %p248 = pnand %p246, %p247
      %p249 = pneg %p248
      // Predicated region
      $region9: #{tpu_custom_call.1} parent=5 // pred_check
        _
      $region10: #{tpu_custom_call.1} parent=5 // pred_check_branch
        %251 = sbr.rel (%p248) target = $region12
      $region11: #{tpu_custom_call.1} parent=5 // pred_region
        %s252 = ssub.s32 %s18, 1
        // Predicated region
        $region13: #{tpu_custom_call.1} parent=11 // pred_check
          %p253 = pneg %p65
        $region14: #{tpu_custom_call.1} parent=11 // pred_check_branch
          %255 = sbr.rel (%p253) target = $region16
        $region15: #{tpu_custom_call.1} parent=11 // pred_region
          _
        $region16: #{tpu_custom_call.1} parent=11 // pred_fallthru
          _
        // Predicated region
        $region17: #{tpu_custom_call.1} parent=11 // pred_check
          %p256 = pneg %p86
        $region18: #{tpu_custom_call.1} parent=11 // pred_check_branch
          %258 = sbr.rel (%p256) target = $region20
        $region19: #{tpu_custom_call.1} parent=11 // pred_region
          _
        $region20: #{tpu_custom_call.1} parent=11 // pred_fallthru
          _
        // Predicated region
        $region21: #{tpu_custom_call.1} parent=11 // pred_check
          %p259 = pneg %p107
        $region22: #{tpu_custom_call.1} parent=11 // pred_check_branch
          %261 = sbr.rel (%p259) target = $region24
        $region23: #{tpu_custom_call.1} parent=11 // pred_region
          _
        $region24: #{tpu_custom_call.1} parent=11 // pred_fallthru
          _
        // Predicated region
        $region25: #{tpu_custom_call.1} parent=11 // pred_check
          %p262 = pneg %p128
        $region26: #{tpu_custom_call.1} parent=11 // pred_check_branch
          %264 = sbr.rel (%p262) target = $region28
        $region27: #{tpu_custom_call.1} parent=11 // pred_region
          _
        $region28: #{tpu_custom_call.1} parent=11 // pred_fallthru
          _
        // Predicated region
        $region29: #{tpu_custom_call.1} parent=11 // pred_check
          %p265 = pneg %p149
        $region30: #{tpu_custom_call.1} parent=11 // pred_check_branch
          %267 = sbr.rel (%p265) target = $region32
        $region31: #{tpu_custom_call.1} parent=11 // pred_region
          _
        $region32: #{tpu_custom_call.1} parent=11 // pred_fallthru
          _
        // Predicated region
        $region33: #{tpu_custom_call.1} parent=11 // pred_check
          %p268 = pneg %p170
        $region34: #{tpu_custom_call.1} parent=11 // pred_check_branch
          %270 = sbr.rel (%p268) target = $region36
        $region35: #{tpu_custom_call.1} parent=11 // pred_region
          _
        $region36: #{tpu_custom_call.1} parent=11 // pred_fallthru
          _
        // Predicated region
        $region37: #{tpu_custom_call.1} parent=11 // pred_check
          %p271 = pneg %p191
        $region38: #{tpu_custom_call.1} parent=11 // pred_check_branch
          %273 = sbr.rel (%p271) target = $region40
        $region39: #{tpu_custom_call.1} parent=11 // pred_region
          _
        $region40: #{tpu_custom_call.1} parent=11 // pred_fallthru
          _
        // Predicated region
        $region41: #{tpu_custom_call.1} parent=11 // pred_check
          %p274 = pneg %p212
        $region42: #{tpu_custom_call.1} parent=11 // pred_check_branch
          %276 = sbr.rel (%p274) target = $region44
        $region43: #{tpu_custom_call.1} parent=11 // pred_region
          _
        $region44: #{tpu_custom_call.1} parent=11 // pred_fallthru
          _
      $region12: #{tpu_custom_call.1} parent=5 // pred_fallthru
        _
      %p277 = scmp.lt.s32.totalorder %s18, 2
      // Predicated region
      $region45: #{tpu_custom_call.1} parent=5 // pred_check
        %p278 = pneg %p277
      $region46: #{tpu_custom_call.1} parent=5 // pred_check_branch
        %280 = sbr.rel (%p278) target = $region48
      $region47: #{tpu_custom_call.1} parent=5 // pred_region
        // Predicated region
        $region49: #{tpu_custom_call.1} parent=47 // pred_check
          %p281 = pneg %p38
        $region50: #{tpu_custom_call.1} parent=47 // pred_check_branch
          %283 = sbr.rel (%p281) target = $region52
        $region51: #{tpu_custom_call.1} parent=47 // pred_region
          %p284 = scmp.lt.s32.totalorder %s18, 1
          %s285 = scalar_select %p284, %s18, 1
          %s286 = smul.addr %s285, 2
          %s287 = smul.addr %s286, 8
          %s288 = scalar_lea.vmem %s0, %s287
        $region52: #{tpu_custom_call.1} parent=47 // pred_fallthru
          _
      $region48: #{tpu_custom_call.1} parent=5 // pred_fallthru
        _
      %p289 = scmp.le.s32.totalorder 1, %s18
      %p290 = scmp.lt.s32.totalorder %s18, 3
      %p291 = pnand %p289, %p290
      %p292 = pneg %p291
      // Predicated region
      $region53: #{tpu_custom_call.1} parent=5 // pred_check
        _
      $region54: #{tpu_custom_call.1} parent=5 // pred_check_branch
        %294 = sbr.rel (%p291) target = $region56
      $region55: #{tpu_custom_call.1} parent=5 // pred_region
        %s295 = ssub.s32 %s18, 1
        %p296 = scmp.lt.s32.totalorder %s23, 1
        %s297 = scalar_select %p296, %s23, 1
        %s298 = smul.addr %s297, 2
        %s299 = smul.addr %s298, 8
        %s300 = scalar_lea.vmem %s0, %s299
        %p301 = pneg %p44
        %p302 = pneg %p41
        %p303 = pneg %p65
        %p304 = pneg %p62
        %p305 = pneg %p86
        %p306 = pneg %p83
        %p307 = pneg %p107
        %p308 = pneg %p104
        %p309 = pneg %p128
        %p310 = pneg %p125
        %p311 = pneg %p149
        %p312 = pneg %p146
        %p313 = pneg %p170
        %p314 = pneg %p167
        %p315 = pneg %p191
        %p316 = pneg %p188
        %p317 = pneg %p212
        %p318 = pneg %p209
        %p319 = pneg %p238
        %p320 = pneg %p235
        %s321 = sand.u32 %s225, 1
        %s322 = scalar_lea.sflag [#allocation3], %s321
        %s323 = sand.u32 %s225, 1
        %s324 = smul.addr %s323, 16
        %s325 = scalar_lea.vmem [#allocation2], %s324
        %p326 = scmp.lt.s32.totalorder %s23, 1
        %s327 = scalar_select %p326, %s23, 1
        %s328 = smul.addr %s327, 2
        %s329 = smul.addr %s328, 8
        %s330 = scalar_lea.vmem %s0, %s329
        %v332 = vld [vmem:[%s330] sm:$0xff]
        %v333 = vld [vmem:[%s330 + $0x8] sm:$0xff]
        %v334 = vld [vmem:[%s1] sm:$0xf]
        %v335 = vld [vmem:[%s1 + $0x4] sm:$0xf]
        %v336 = vld [vmem:[%s1 + $0x8] sm:$0xf]
        %v337 = vld [vmem:[%s1 + $0xc] sm:$0xf]
        %v338 = vpack.c.bf16 %v332, %v332
        %v339 = vpack.c.bf16 %v333, %v333
        %v340 = vld [vmem:[%s2] sm:$0xff]
        %v341 = vld [vmem:[%s2 + $0x8] sm:$0xff]
        %v342 = vld [vmem:[%s2 + $0x10] sm:$0xff]
        %v343 = vld [vmem:[%s2 + $0x18] sm:$0xff]
        %345 = vset.pattern.permute.xlu0 0
        %346 = vperm.xlu0 %345, %v340
        %v347 = vpop.permute.xlu0 %346
        %350 = vset.pattern.permute.xlu0 0
        %351 = vperm.xlu0 %350, %v341
        %v352 = vpop.permute.xlu0 %351
        %355 = vset.pattern.permute.xlu0 0
        %356 = vperm.xlu0 %355, %v342
        %v357 = vpop.permute.xlu0 %356
        %360 = vset.pattern.permute.xlu0 0
        %361 = vperm.xlu0 %360, %v343
        %v362 = vpop.permute.xlu0 %361
        %v368 = vunpack.c.l.b16 %v334
        %v369 = vunpack.c.l.b16 %v335
        %v370 = vunpack.c.l.b16 %v336
        %v371 = vunpack.c.l.b16 %v337
        %v372 = vpack.c.b16 %v369, %v368
        %v373 = vpack.c.b16 %v371, %v370
        %vm374 = vcmask 64512
        %v376 = vsel %vm374, %v372, 0
        %v379 = vsel %vm374, %v373, 0
        %vm381 = vcmask 1043456
        %v383 = vsel %vm381, %v338, 0
        %v386 = vsel %vm381, %v339, 0
        %388 = vmatprep.subr.bf16.mxu0 %v386
        %389 = vmatpush1.bf16.msra.mxu0 %v383
        %390 = vmatprep.subr.bf16.mxu0 0
        %391 = vmatpush1.bf16.msra.mxu0 0
        %392 = vmatprep.subr.bf16.mxu0 0
        %393 = vmatpush1.bf16.msra.mxu0 0
        %394 = vmatprep.subr.bf16.mxu0 0
        %395 = vmatpush1.bf16.msra.mxu0 0
        %396 = vmatprep.subr.bf16.mxu0 0
        %397 = vmatpush1.bf16.msra.mxu0 0
        %398 = vmatprep.subr.bf16.mxu0 0
        %399 = vmatpush1.bf16.msra.mxu0 0
        %400 = vmatprep.subr.bf16.mxu0 0
        %401 = vmatpush1.bf16.msra.mxu0 0
        %402 = vmatprep.subr.bf16.mxu0 0
        %403 = vmatpush1.bf16.msra.mxu0 0
        %404 = vmatprep.subr.bf16.mxu0 0
        %405 = vmatpush1.bf16.msra.mxu0 0
        %406 = vmatprep.subr.bf16.mxu0 0
        %407 = vmatpush1.bf16.msra.mxu0 0
        %408 = vmatprep.subr.bf16.mxu0 0
        %409 = vmatpush1.bf16.msra.mxu0 0
        %410 = vmatprep.subr.bf16.mxu0 0
        %411 = vmatpush1.bf16.msra.mxu0 0
        %412 = vmatprep.subr.bf16.mxu0 0
        %413 = vmatpush1.bf16.msra.mxu0 0
        %414 = vmatprep.subr.bf16.mxu0 0
        %415 = vmatpush1.bf16.msra.mxu0 0
        %416 = vmatprep.subr.bf16.mxu0 0
        %417 = vmatpush1.bf16.msra.mxu0 0
        %418 = vmatprep.subr.bf16.mxu0 0
        %419 = vmatpush1.bf16.msra.mxu0 0
        %420 = vmatprep.mubr.bf16.mxu0 0
        %421 = vmatmul.mubr.bf16.gmra.mrb[0].mxu0 %v376
        %v422 = vpop.f32.mrb[0].mxu0
        %v423 = vadd.f32 %v347, %v422
        %v424 = vpop.f32.mrb[0].mxu0
        %v425 = vadd.f32 %v347, %v424
        %v426 = vpop.f32.mrb[0].mxu0
        %v427 = vadd.f32 %v352, %v426
        %v428 = vpop.f32.mrb[0].mxu0
        %v429 = vadd.f32 %v352, %v428
        %430 = vmatprep.mubr.bf16.mxu0 0
        %431 = vmatmul.mubr.bf16.gmra.mrb[0].mxu0 %v379
        %v432 = vpop.f32.mrb[0].mxu0
        %v433 = vadd.f32 %v357, %v432
        %v434 = vpop.f32.mrb[0].mxu0
        %v435 = vadd.f32 %v357, %v434
        %v436 = vpop.f32.mrb[0].mxu0
        %v437 = vadd.f32 %v362, %v436
        %v438 = vpop.f32.mrb[0].mxu0
        %v439 = vadd.f32 %v362, %v438
        %440 = vdwg.mxu0
        %v441 = vmax.f32 %v423, 0.0
        %v442 = vmax.f32 %v425, 0.0
        %v443 = vmax.f32 %v427, 0.0
        %v444 = vmax.f32 %v429, 0.0
        %v445 = vmax.f32 %v433, 0.0
        %v446 = vmax.f32 %v435, 0.0
        %v447 = vmax.f32 %v437, 0.0
        %v448 = vmax.f32 %v439, 0.0
        %v449 = vld [vmem:[%s7] sm:$0x77]
        %v450 = vld [vmem:[%s8] sm:$0x77]
        %v451 = vld [vmem:[%s3] sm:$0xff]
        %v452 = vld [vmem:[%s3 + $0x8] sm:$0xff]
        %v453 = vld [vmem:[%s3 + $0x10] sm:$0xff]
        %v454 = vld [vmem:[%s3 + $0x18] sm:$0xff]
        %v455 = vld [vmem:[%s3 + $0x20] sm:$0xff]
        %v456 = vld [vmem:[%s3 + $0x28] sm:$0xff]
        %v457 = vld [vmem:[%s3 + $0x30] sm:$0xff]
        %v458 = vld [vmem:[%s3 + $0x38] sm:$0xff]
        %v459 = vld [vmem:[%s3 + $0x40] sm:$0xff]
        %v460 = vld [vmem:[%s3 + $0x48] sm:$0xff]
        %v461 = vld [vmem:[%s3 + $0x50] sm:$0xff]
        %v462 = vld [vmem:[%s3 + $0x58] sm:$0xff]
        %v463 = vld [vmem:[%s3 + $0x60] sm:$0xff]
        %v464 = vld [vmem:[%s3 + $0x68] sm:$0xff]
        %v465 = vld [vmem:[%s3 + $0x70] sm:$0xff]
        %v466 = vld [vmem:[%s3 + $0x78] sm:$0xff]
        %v467 = vld [vmem:[%s3 + $0x80] sm:$0xff]
        %v468 = vld [vmem:[%s3 + $0x88] sm:$0xff]
        %v469 = vld [vmem:[%s3 + $0x90] sm:$0xff]
        %v470 = vld [vmem:[%s3 + $0x98] sm:$0xff]
        %v471 = vld [vmem:[%s3 + $0xa0] sm:$0xff]
        %v472 = vld [vmem:[%s3 + $0xa8] sm:$0xff]
        %v473 = vld [vmem:[%s3 + $0xb0] sm:$0xff]
        %v474 = vld [vmem:[%s3 + $0xb8] sm:$0xff]
        %v475 = vld [vmem:[%s3 + $0xc0] sm:$0xff]
        %v476 = vld [vmem:[%s3 + $0xc8] sm:$0xff]
        %v477 = vld [vmem:[%s3 + $0xd0] sm:$0xff]
        %v478 = vld [vmem:[%s3 + $0xd8] sm:$0xff]
        %v479 = vld [vmem:[%s3 + $0xe0] sm:$0xff]
        %v480 = vld [vmem:[%s3 + $0xe8] sm:$0xff]
        %v481 = vld [vmem:[%s3 + $0xf0] sm:$0xff]
        %v482 = vld [vmem:[%s3 + $0xf8] sm:$0xff]
        %v483 = vld [vmem:[%s3 + $0x100] sm:$0xff]
        %v484 = vld [vmem:[%s3 + $0x108] sm:$0xff]
        %v485 = vld [vmem:[%s3 + $0x110] sm:$0xff]
        %v486 = vld [vmem:[%s3 + $0x118] sm:$0xff]
        %487 = vrot.lane.b32.xlu0 %v441, 17
        %v488 = vpop.permute.xlu0 %487
        %489 = vrot.lane.b32.xlu0 %v443, 17
        %v490 = vpop.permute.xlu0 %489
        %491 = vrot.lane.b32.xlu0 %v445, 17
        %v492 = vpop.permute.xlu0 %491
        %493 = vrot.lane.b32.xlu0 %v447, 17
        %v494 = vpop.permute.xlu0 %493
        %495 = vrot.lane.b32.xlu0 %v442, 17
        %v496 = vpop.permute.xlu0 %495
        %497 = vrot.lane.b32.xlu0 %v444, 17
        %v498 = vpop.permute.xlu0 %497
        %499 = vrot.lane.b32.xlu0 %v446, 17
        %v500 = vpop.permute.xlu0 %499
        %501 = vrot.lane.b32.xlu0 %v448, 17
        %v502 = vpop.permute.xlu0 %501
        %v503 = vlaneseq
        %v504 = vand.u32 %v503, 127
        %vm505 = vcmp.lt.s32.totalorder %v504, 17
        %v506 = vsel %vm505, %v488, %v496
        %v507 = vsel %vm505, %v490, %v498
        %v508 = vsel %vm505, %v492, %v500
        %v509 = vsel %vm505, %v494, %v502
        %v510 = vsel %vm505, %v496, %v488
        %v511 = vsel %vm505, %v498, %v490
        %v512 = vsel %vm505, %v500, %v492
        %v513 = vsel %vm505, %v502, %v494
        %515 = vset.pattern.permute.xlu0 0
        %516 = vperm.xlu0 %515, %v451
        %v517 = vpop.permute.xlu0 %516
        %520 = vset.pattern.permute.xlu0 0
        %521 = vperm.xlu0 %520, %v452
        %v522 = vpop.permute.xlu0 %521
        %525 = vset.pattern.permute.xlu0 0
        %526 = vperm.xlu0 %525, %v453
        %v527 = vpop.permute.xlu0 %526
        %530 = vset.pattern.permute.xlu0 0
        %531 = vperm.xlu0 %530, %v454
        %v532 = vpop.permute.xlu0 %531
        %v534 = vmul.f32 %v510, %v517
        %v535 = vmul.f32 %v506, %v517
        %v536 = vmul.f32 %v511, %v522
        %v537 = vmul.f32 %v507, %v522
        %v538 = vmul.f32 %v512, %v527
        %v539 = vmul.f32 %v508, %v527
        %v540 = vmul.f32 %v513, %v532
        %v541 = vmul.f32 %v509, %v532
        %v542 = vmul.f32 %v449, %v450
        %v544 = vlaneseq
        %v545 = vshrl.u32 %v544, 7
        %v546 = vsub.s32 0, %v545
        %v547 = vrot.slane %v542, %v546
        %v548 = vlaneseq
        %v549 = vshrl.u32 %v548, 7
        %v550 = vsub.s32 4, %v549
        %v551 = vrot.slane %v542, %v550
        %v554 = vlaneseq
        %v555 = vshrl.u32 %v554, 7
        %v556 = vsub.s32 0, %v555
        %v557 = vrot.slane %v547, %v556
        %v558 = vlaneseq
        %v559 = vshrl.u32 %v558, 7
        %v560 = vsub.s32 0, %v559
        %v561 = vrot.slane %v551, %v560
        %v562 = vmul.f32 %v534, %v557
        %v563 = vmul.f32 %v535, %v561
        %v564 = vmul.f32 %v536, %v557
        %v565 = vmul.f32 %v537, %v561
        %v566 = vmul.f32 %v538, %v557
        %v567 = vmul.f32 %v539, %v561
        %v568 = vmul.f32 %v540, %v557
        %v569 = vmul.f32 %v541, %v561
        %v570 = vadd.f32 %v562, 0.0
        %v571 = vadd.f32 %v563, 0.0
        %v572 = vadd.f32 %v564, 0.0
        %v573 = vadd.f32 %v565, 0.0
        %v574 = vadd.f32 %v566, 0.0
        %v575 = vadd.f32 %v567, 0.0
        %v576 = vadd.f32 %v568, 0.0
        %v577 = vadd.f32 %v569, 0.0
        %578 = vrot.lane.b32.xlu0 %v441, 16
        %v579 = vpop.permute.xlu0 %578
        %580 = vrot.lane.b32.xlu0 %v443, 16
        %v581 = vpop.permute.xlu0 %580
        %582 = vrot.lane.b32.xlu0 %v445, 16
        %v583 = vpop.permute.xlu0 %582
        %584 = vrot.lane.b32.xlu0 %v447, 16
        %v585 = vpop.permute.xlu0 %584
        %586 = vrot.lane.b32.xlu0 %v442, 16
        %v587 = vpop.permute.xlu0 %586
        %588 = vrot.lane.b32.xlu0 %v444, 16
        %v589 = vpop.permute.xlu0 %588
        %590 = vrot.lane.b32.xlu0 %v446, 16
        %v591 = vpop.permute.xlu0 %590
        %592 = vrot.lane.b32.xlu0 %v448, 16
        %v593 = vpop.permute.xlu0 %592
        %vm594 = vcmp.lt.s32.totalorder %v504, 16
        %v595 = vsel %vm594, %v579, %v587
        %v596 = vsel %vm594, %v581, %v589
        %v597 = vsel %vm594, %v583, %v591
        %v598 = vsel %vm594, %v585, %v593
        %v599 = vsel %vm594, %v587, %v579
        %v600 = vsel %vm594, %v589, %v581
        %v601 = vsel %vm594, %v591, %v583
        %v602 = vsel %vm594, %v593, %v585
        %604 = vset.pattern.permute.xlu0 0
        %605 = vperm.xlu0 %604, %v455
        %v606 = vpop.permute.xlu0 %605
        %609 = vset.pattern.permute.xlu0 0
        %610 = vperm.xlu0 %609, %v456
        %v611 = vpop.permute.xlu0 %610
        %614 = vset.pattern.permute.xlu0 0
        %615 = vperm.xlu0 %614, %v457
        %v616 = vpop.permute.xlu0 %615
        %619 = vset.pattern.permute.xlu0 0
        %620 = vperm.xlu0 %619, %v458
        %v621 = vpop.permute.xlu0 %620
        %v623 = vmul.f32 %v599, %v606
        %v624 = vmul.f32 %v595, %v606
        %v625 = vmul.f32 %v600, %v611
        %v626 = vmul.f32 %v596, %v611
        %v627 = vmul.f32 %v601, %v616
        %v628 = vmul.f32 %v597, %v616
        %v629 = vmul.f32 %v602, %v621
        %v630 = vmul.f32 %v598, %v621
        %v632 = vlaneseq
        %v633 = vshrl.u32 %v632, 7
        %v634 = vsub.s32 0, %v633
        %v635 = vrot.slane %v449, %v634
        %v636 = vlaneseq
        %v637 = vshrl.u32 %v636, 7
        %v638 = vsub.s32 4, %v637
        %v639 = vrot.slane %v449, %v638
        %v642 = vlaneseq
        %v643 = vshrl.u32 %v642, 7
        %v644 = vsub.s32 0, %v643
        %v645 = vrot.slane %v635, %v644
        %v646 = vlaneseq
        %v647 = vshrl.u32 %v646, 7
        %v648 = vsub.s32 0, %v647
        %v649 = vrot.slane %v639, %v648
        %v650 = vmul.f32 %v623, %v645
        %v651 = vmul.f32 %v624, %v649
        %v652 = vmul.f32 %v625, %v645
        %v653 = vmul.f32 %v626, %v649
        %v654 = vmul.f32 %v627, %v645
        %v655 = vmul.f32 %v628, %v649
        %v656 = vmul.f32 %v629, %v645
        %v657 = vmul.f32 %v630, %v649
        %v658 = vadd.f32 %v570, %v650
        %v659 = vadd.f32 %v571, %v651
        %v660 = vadd.f32 %v572, %v652
        %v661 = vadd.f32 %v573, %v653
        %v662 = vadd.f32 %v574, %v654
        %v663 = vadd.f32 %v575, %v655
        %v664 = vadd.f32 %v576, %v656
        %v665 = vadd.f32 %v577, %v657
        %666 = vrot.lane.b32.xlu0 %v441, 15
        %v667 = vpop.permute.xlu0 %666
        %668 = vrot.lane.b32.xlu0 %v443, 15
        %v669 = vpop.permute.xlu0 %668
        %670 = vrot.lane.b32.xlu0 %v445, 15
        %v671 = vpop.permute.xlu0 %670
        %672 = vrot.lane.b32.xlu0 %v447, 15
        %v673 = vpop.permute.xlu0 %672
        %674 = vrot.lane.b32.xlu0 %v442, 15
        %v675 = vpop.permute.xlu0 %674
        %676 = vrot.lane.b32.xlu0 %v444, 15
        %v677 = vpop.permute.xlu0 %676
        %678 = vrot.lane.b32.xlu0 %v446, 15
        %v679 = vpop.permute.xlu0 %678
        %680 = vrot.lane.b32.xlu0 %v448, 15
        %v681 = vpop.permute.xlu0 %680
        %vm682 = vcmp.lt.s32.totalorder %v504, 15
        %v683 = vsel %vm682, %v667, %v675
        %v684 = vsel %vm682, %v669, %v677
        %v685 = vsel %vm682, %v671, %v679
        %v686 = vsel %vm682, %v673, %v681
        %v687 = vsel %vm682, %v675, %v667
        %v688 = vsel %vm682, %v677, %v669
        %v689 = vsel %vm682, %v679, %v671
        %v690 = vsel %vm682, %v681, %v673
        %692 = vset.pattern.permute.xlu0 0
        %693 = vperm.xlu0 %692, %v459
        %v694 = vpop.permute.xlu0 %693
        %697 = vset.pattern.permute.xlu0 0
        %698 = vperm.xlu0 %697, %v460
        %v699 = vpop.permute.xlu0 %698
        %702 = vset.pattern.permute.xlu0 0
        %703 = vperm.xlu0 %702, %v461
        %v704 = vpop.permute.xlu0 %703
        %707 = vset.pattern.permute.xlu0 0
        %708 = vperm.xlu0 %707, %v462
        %v709 = vpop.permute.xlu0 %708
        %v711 = vmul.f32 %v687, %v694
        %v712 = vmul.f32 %v683, %v694
        %v713 = vmul.f32 %v688, %v699
        %v714 = vmul.f32 %v684, %v699
        %v715 = vmul.f32 %v689, %v704
        %v716 = vmul.f32 %v685, %v704
        %v717 = vmul.f32 %v690, %v709
        %v718 = vmul.f32 %v686, %v709
        %v720 = vrot.slane %v450, 6
        %v721 = vrot.slane %v720, 4
        %v723 = vmul.f32 %v449, %v721
        %v725 = vlaneseq
        %v726 = vshrl.u32 %v725, 7
        %v727 = vsub.s32 0, %v726
        %v728 = vrot.slane %v723, %v727
        %v729 = vlaneseq
        %v730 = vshrl.u32 %v729, 7
        %v731 = vsub.s32 4, %v730
        %v732 = vrot.slane %v723, %v731
        %v735 = vlaneseq
        %v736 = vshrl.u32 %v735, 7
        %v737 = vsub.s32 0, %v736
        %v738 = vrot.slane %v728, %v737
        %v739 = vlaneseq
        %v740 = vshrl.u32 %v739, 7
        %v741 = vsub.s32 0, %v740
        %v742 = vrot.slane %v732, %v741
        %v743 = vmul.f32 %v711, %v738
        %v744 = vmul.f32 %v712, %v742
        %v745 = vmul.f32 %v713, %v738
        %v746 = vmul.f32 %v714, %v742
        %v747 = vmul.f32 %v715, %v738
        %v748 = vmul.f32 %v716, %v742
        %v749 = vmul.f32 %v717, %v738
        %v750 = vmul.f32 %v718, %v742
        %v751 = vadd.f32 %v658, %v743
        %v752 = vadd.f32 %v659, %v744
        %v753 = vadd.f32 %v660, %v745
        %v754 = vadd.f32 %v661, %v746
        %v755 = vadd.f32 %v662, %v747
        %v756 = vadd.f32 %v663, %v748
        %v757 = vadd.f32 %v664, %v749
        %v758 = vadd.f32 %v665, %v750
        %759 = vrot.lane.b32.xlu0 %v441, 1
        %v760 = vpop.permute.xlu0 %759
        %761 = vrot.lane.b32.xlu0 %v443, 1
        %v762 = vpop.permute.xlu0 %761
        %763 = vrot.lane.b32.xlu0 %v445, 1
        %v764 = vpop.permute.xlu0 %763
        %765 = vrot.lane.b32.xlu0 %v447, 1
        %v766 = vpop.permute.xlu0 %765
        %767 = vrot.lane.b32.xlu0 %v442, 1
        %v768 = vpop.permute.xlu0 %767
        %769 = vrot.lane.b32.xlu0 %v444, 1
        %v770 = vpop.permute.xlu0 %769
        %771 = vrot.lane.b32.xlu0 %v446, 1
        %v772 = vpop.permute.xlu0 %771
        %773 = vrot.lane.b32.xlu0 %v448, 1
        %v774 = vpop.permute.xlu0 %773
        %vm775 = vcmp.lt.s32.totalorder %v504, 1
        %v776 = vsel %vm775, %v760, %v768
        %v777 = vsel %vm775, %v762, %v770
        %v778 = vsel %vm775, %v764, %v772
        %v779 = vsel %vm775, %v766, %v774
        %v780 = vsel %vm775, %v768, %v760
        %v781 = vsel %vm775, %v770, %v762
        %v782 = vsel %vm775, %v772, %v764
        %v783 = vsel %vm775, %v774, %v766
        %785 = vset.pattern.permute.xlu0 0
        %786 = vperm.xlu0 %785, %v463
        %v787 = vpop.permute.xlu0 %786
        %790 = vset.pattern.permute.xlu0 0
        %791 = vperm.xlu0 %790, %v464
        %v792 = vpop.permute.xlu0 %791
        %795 = vset.pattern.permute.xlu0 0
        %796 = vperm.xlu0 %795, %v465
        %v797 = vpop.permute.xlu0 %796
        %800 = vset.pattern.permute.xlu0 0
        %801 = vperm.xlu0 %800, %v466
        %v802 = vpop.permute.xlu0 %801
        %v804 = vmul.f32 %v780, %v787
        %v805 = vmul.f32 %v776, %v787
        %v806 = vmul.f32 %v781, %v792
        %v807 = vmul.f32 %v777, %v792
        %v808 = vmul.f32 %v782, %v797
        %v809 = vmul.f32 %v778, %v797
        %v810 = vmul.f32 %v783, %v802
        %v811 = vmul.f32 %v779, %v802
        %v812 = vlaneseq
        %v813 = vshrl.u32 %v812, 7
        %v814 = vsub.s32 0, %v813
        %v815 = vrot.slane %v450, %v814
        %v816 = vlaneseq
        %v817 = vshrl.u32 %v816, 7
        %v818 = vsub.s32 4, %v817
        %v819 = vrot.slane %v450, %v818
        %v822 = vlaneseq
        %v823 = vshrl.u32 %v822, 7
        %v824 = vsub.s32 0, %v823
        %v825 = vrot.slane %v815, %v824
        %v826 = vlaneseq
        %v827 = vshrl.u32 %v826, 7
        %v828 = vsub.s32 0, %v827
        %v829 = vrot.slane %v819, %v828
        %v830 = vmul.f32 %v804, %v825
        %v831 = vmul.f32 %v805, %v829
        %v832 = vmul.f32 %v806, %v825
        %v833 = vmul.f32 %v807, %v829
        %v834 = vmul.f32 %v808, %v825
        %v835 = vmul.f32 %v809, %v829
        %v836 = vmul.f32 %v810, %v825
        %v837 = vmul.f32 %v811, %v829
        %v838 = vadd.f32 %v751, %v830
        %v839 = vadd.f32 %v752, %v831
        %v840 = vadd.f32 %v753, %v832
        %v841 = vadd.f32 %v754, %v833
        %v842 = vadd.f32 %v755, %v834
        %v843 = vadd.f32 %v756, %v835
        %v844 = vadd.f32 %v757, %v836
        %v845 = vadd.f32 %v758, %v837
        %847 = vset.pattern.permute.xlu0 0
        %848 = vperm.xlu0 %847, %v467
        %v849 = vpop.permute.xlu0 %848
        %852 = vset.pattern.permute.xlu0 0
        %853 = vperm.xlu0 %852, %v468
        %v854 = vpop.permute.xlu0 %853
        %857 = vset.pattern.permute.xlu0 0
        %858 = vperm.xlu0 %857, %v469
        %v859 = vpop.permute.xlu0 %858
        %862 = vset.pattern.permute.xlu0 0
        %863 = vperm.xlu0 %862, %v470
        %v864 = vpop.permute.xlu0 %863
        %v866 = vmul.f32 %v441, %v849
        %v867 = vmul.f32 %v442, %v849
        %v868 = vmul.f32 %v443, %v854
        %v869 = vmul.f32 %v444, %v854
        %v870 = vmul.f32 %v445, %v859
        %v871 = vmul.f32 %v446, %v859
        %v872 = vmul.f32 %v447, %v864
        %v873 = vmul.f32 %v448, %v864
        %v874 = vadd.f32 %v838, %v866
        %v875 = vadd.f32 %v839, %v867
        %v876 = vadd.f32 %v840, %v868
        %v877 = vadd.f32 %v841, %v869
        %v878 = vadd.f32 %v842, %v870
        %v879 = vadd.f32 %v843, %v871
        %v880 = vadd.f32 %v844, %v872
        %v881 = vadd.f32 %v845, %v873
        %882 = vrot.lane.b32.xlu0 %v441, 127
        %v883 = vpop.permute.xlu0 %882
        %884 = vrot.lane.b32.xlu0 %v443, 127
        %v885 = vpop.permute.xlu0 %884
        %886 = vrot.lane.b32.xlu0 %v445, 127
        %v887 = vpop.permute.xlu0 %886
        %888 = vrot.lane.b32.xlu0 %v447, 127
        %v889 = vpop.permute.xlu0 %888
        %890 = vrot.lane.b32.xlu0 %v442, 127
        %v891 = vpop.permute.xlu0 %890
        %892 = vrot.lane.b32.xlu0 %v444, 127
        %v893 = vpop.permute.xlu0 %892
        %894 = vrot.lane.b32.xlu0 %v446, 127
        %v895 = vpop.permute.xlu0 %894
        %896 = vrot.lane.b32.xlu0 %v448, 127
        %v897 = vpop.permute.xlu0 %896
        %vm898 = vcmp.lt.s32.totalorder %v504, 127
        %v899 = vsel %vm898, %v883, %v891
        %v900 = vsel %vm898, %v885, %v893
        %v901 = vsel %vm898, %v887, %v895
        %v902 = vsel %vm898, %v889, %v897
        %v903 = vsel %vm898, %v891, %v883
        %v904 = vsel %vm898, %v893, %v885
        %v905 = vsel %vm898, %v895, %v887
        %v906 = vsel %vm898, %v897, %v889
        %908 = vset.pattern.permute.xlu0 0
        %909 = vperm.xlu0 %908, %v471
        %v910 = vpop.permute.xlu0 %909
        %913 = vset.pattern.permute.xlu0 0
        %914 = vperm.xlu0 %913, %v472
        %v915 = vpop.permute.xlu0 %914
        %918 = vset.pattern.permute.xlu0 0
        %919 = vperm.xlu0 %918, %v473
        %v920 = vpop.permute.xlu0 %919
        %923 = vset.pattern.permute.xlu0 0
        %924 = vperm.xlu0 %923, %v474
        %v925 = vpop.permute.xlu0 %924
        %v927 = vmul.f32 %v899, %v910
        %v928 = vmul.f32 %v903, %v910
        %v929 = vmul.f32 %v900, %v915
        %v930 = vmul.f32 %v904, %v915
        %v931 = vmul.f32 %v901, %v920
        %v932 = vmul.f32 %v905, %v920
        %v933 = vmul.f32 %v902, %v925
        %v934 = vmul.f32 %v906, %v925
        %v935 = vlaneseq
        %v936 = vshrl.u32 %v935, 7
        %v937 = vsub.s32 2, %v936
        %v938 = vrot.slane %v450, %v937
        %v939 = vlaneseq
        %v940 = vshrl.u32 %v939, 7
        %v941 = vsub.s32 6, %v940
        %v942 = vrot.slane %v450, %v941
        %v945 = vlaneseq
        %v946 = vshrl.u32 %v945, 7
        %v947 = vsub.s32 2, %v946
        %v948 = vrot.slane %v938, %v947
        %v949 = vlaneseq
        %v950 = vshrl.u32 %v949, 7
        %v951 = vsub.s32 2, %v950
        %v952 = vrot.slane %v942, %v951
        %v953 = vmul.f32 %v927, %v948
        %v954 = vmul.f32 %v928, %v952
        %v955 = vmul.f32 %v929, %v948
        %v956 = vmul.f32 %v930, %v952
        %v957 = vmul.f32 %v931, %v948
        %v958 = vmul.f32 %v932, %v952
        %v959 = vmul.f32 %v933, %v948
        %v960 = vmul.f32 %v934, %v952
        %v961 = vadd.f32 %v874, %v953
        %v962 = vadd.f32 %v875, %v954
        %v963 = vadd.f32 %v876, %v955
        %v964 = vadd.f32 %v877, %v956
        %v965 = vadd.f32 %v878, %v957
        %v966 = vadd.f32 %v879, %v958
        %v967 = vadd.f32 %v880, %v959
        %v968 = vadd.f32 %v881, %v960
        %969 = vrot.lane.b32.xlu0 %v441, 113
        %v970 = vpop.permute.xlu0 %969
        %971 = vrot.lane.b32.xlu0 %v443, 113
        %v972 = vpop.permute.xlu0 %971
        %973 = vrot.lane.b32.xlu0 %v445, 113
        %v974 = vpop.permute.xlu0 %973
        %975 = vrot.lane.b32.xlu0 %v447, 113
        %v976 = vpop.permute.xlu0 %975
        %977 = vrot.lane.b32.xlu0 %v442, 113
        %v978 = vpop.permute.xlu0 %977
        %979 = vrot.lane.b32.xlu0 %v444, 113
        %v980 = vpop.permute.xlu0 %979
        %981 = vrot.lane.b32.xlu0 %v446, 113
        %v982 = vpop.permute.xlu0 %981
        %983 = vrot.lane.b32.xlu0 %v448, 113
        %v984 = vpop.permute.xlu0 %983
        %vm985 = vcmp.lt.s32.totalorder %v504, 113
        %v986 = vsel %vm985, %v970, %v978
        %v987 = vsel %vm985, %v972, %v980
        %v988 = vsel %vm985, %v974, %v982
        %v989 = vsel %vm985, %v976, %v984
        %v990 = vsel %vm985, %v978, %v970
        %v991 = vsel %vm985, %v980, %v972
        %v992 = vsel %vm985, %v982, %v974
        %v993 = vsel %vm985, %v984, %v976
        %995 = vset.pattern.permute.xlu0 0
        %996 = vperm.xlu0 %995, %v475
        %v997 = vpop.permute.xlu0 %996
        %1000 = vset.pattern.permute.xlu0 0
        %1001 = vperm.xlu0 %1000, %v476
        %v1002 = vpop.permute.xlu0 %1001
        %1005 = vset.pattern.permute.xlu0 0
        %1006 = vperm.xlu0 %1005, %v477
        %v1007 = vpop.permute.xlu0 %1006
        %1010 = vset.pattern.permute.xlu0 0
        %1011 = vperm.xlu0 %1010, %v478
        %v1012 = vpop.permute.xlu0 %1011
        %v1014 = vmul.f32 %v986, %v997
        %v1015 = vmul.f32 %v990, %v997
        %v1016 = vmul.f32 %v987, %v1002
        %v1017 = vmul.f32 %v991, %v1002
        %v1018 = vmul.f32 %v988, %v1007
        %v1019 = vmul.f32 %v992, %v1007
        %v1020 = vmul.f32 %v989, %v1012
        %v1021 = vmul.f32 %v993, %v1012
        %v1023 = vmul.f32 %v449, %v720
        %v1025 = vlaneseq
        %v1026 = vshrl.u32 %v1025, 7
        %v1027 = vsub.s32 2, %v1026
        %v1028 = vrot.slane %v1023, %v1027
        %v1029 = vlaneseq
        %v1030 = vshrl.u32 %v1029, 7
        %v1031 = vsub.s32 6, %v1030
        %v1032 = vrot.slane %v1023, %v1031
        %v1035 = vlaneseq
        %v1036 = vshrl.u32 %v1035, 7
        %v1037 = vsub.s32 2, %v1036
        %v1038 = vrot.slane %v1028, %v1037
        %v1039 = vlaneseq
        %v1040 = vshrl.u32 %v1039, 7
        %v1041 = vsub.s32 2, %v1040
        %v1042 = vrot.slane %v1032, %v1041
        %v1043 = vmul.f32 %v1014, %v1038
        %v1044 = vmul.f32 %v1015, %v1042
        %v1045 = vmul.f32 %v1016, %v1038
        %v1046 = vmul.f32 %v1017, %v1042
        %v1047 = vmul.f32 %v1018, %v1038
        %v1048 = vmul.f32 %v1019, %v1042
        %v1049 = vmul.f32 %v1020, %v1038
        %v1050 = vmul.f32 %v1021, %v1042
        %v1051 = vadd.f32 %v961, %v1043
        %v1052 = vadd.f32 %v962, %v1044
        %v1053 = vadd.f32 %v963, %v1045
        %v1054 = vadd.f32 %v964, %v1046
        %v1055 = vadd.f32 %v965, %v1047
        %v1056 = vadd.f32 %v966, %v1048
        %v1057 = vadd.f32 %v967, %v1049
        %v1058 = vadd.f32 %v968, %v1050
        %1059 = vrot.lane.b32.xlu0 %v441, 112
        %v1060 = vpop.permute.xlu0 %1059
        %1061 = vrot.lane.b32.xlu0 %v443, 112
        %v1062 = vpop.permute.xlu0 %1061
        %1063 = vrot.lane.b32.xlu0 %v445, 112
        %v1064 = vpop.permute.xlu0 %1063
        %1065 = vrot.lane.b32.xlu0 %v447, 112
        %v1066 = vpop.permute.xlu0 %1065
        %1067 = vrot.lane.b32.xlu0 %v442, 112
        %v1068 = vpop.permute.xlu0 %1067
        %1069 = vrot.lane.b32.xlu0 %v444, 112
        %v1070 = vpop.permute.xlu0 %1069
        %1071 = vrot.lane.b32.xlu0 %v446, 112
        %v1072 = vpop.permute.xlu0 %1071
        %1073 = vrot.lane.b32.xlu0 %v448, 112
        %v1074 = vpop.permute.xlu0 %1073
        %vm1075 = vcmp.lt.s32.totalorder %v504, 112
        %v1076 = vsel %vm1075, %v1060, %v1068
        %v1077 = vsel %vm1075, %v1062, %v1070
        %v1078 = vsel %vm1075, %v1064, %v1072
        %v1079 = vsel %vm1075, %v1066, %v1074
        %v1080 = vsel %vm1075, %v1068, %v1060
        %v1081 = vsel %vm1075, %v1070, %v1062
        %v1082 = vsel %vm1075, %v1072, %v1064
        %v1083 = vsel %vm1075, %v1074, %v1066
        %1085 = vset.pattern.permute.xlu0 0
        %1086 = vperm.xlu0 %1085, %v479
        %v1087 = vpop.permute.xlu0 %1086
        %1090 = vset.pattern.permute.xlu0 0
        %1091 = vperm.xlu0 %1090, %v480
        %v1092 = vpop.permute.xlu0 %1091
        %1095 = vset.pattern.permute.xlu0 0
        %1096 = vperm.xlu0 %1095, %v481
        %v1097 = vpop.permute.xlu0 %1096
        %1100 = vset.pattern.permute.xlu0 0
        %1101 = vperm.xlu0 %1100, %v482
        %v1102 = vpop.permute.xlu0 %1101
        %v1104 = vmul.f32 %v1076, %v1087
        %v1105 = vmul.f32 %v1080, %v1087
        %v1106 = vmul.f32 %v1077, %v1092
        %v1107 = vmul.f32 %v1081, %v1092
        %v1108 = vmul.f32 %v1078, %v1097
        %v1109 = vmul.f32 %v1082, %v1097
        %v1110 = vmul.f32 %v1079, %v1102
        %v1111 = vmul.f32 %v1083, %v1102
        %v1112 = vlaneseq
        %v1113 = vshrl.u32 %v1112, 7
        %v1114 = vsub.s32 2, %v1113
        %v1115 = vrot.slane %v449, %v1114
        %v1116 = vlaneseq
        %v1117 = vshrl.u32 %v1116, 7
        %v1118 = vsub.s32 6, %v1117
        %v1119 = vrot.slane %v449, %v1118
        %v1122 = vlaneseq
        %v1123 = vshrl.u32 %v1122, 7
        %v1124 = vsub.s32 2, %v1123
        %v1125 = vrot.slane %v1115, %v1124
        %v1126 = vlaneseq
        %v1127 = vshrl.u32 %v1126, 7
        %v1128 = vsub.s32 2, %v1127
        %v1129 = vrot.slane %v1119, %v1128
        %v1130 = vmul.f32 %v1104, %v1125
        %v1131 = vmul.f32 %v1105, %v1129
        %v1132 = vmul.f32 %v1106, %v1125
        %v1133 = vmul.f32 %v1107, %v1129
        %v1134 = vmul.f32 %v1108, %v1125
        %v1135 = vmul.f32 %v1109, %v1129
        %v1136 = vmul.f32 %v1110, %v1125
        %v1137 = vmul.f32 %v1111, %v1129
        %v1138 = vadd.f32 %v1051, %v1130
        %v1139 = vadd.f32 %v1052, %v1131
        %v1140 = vadd.f32 %v1053, %v1132
        %v1141 = vadd.f32 %v1054, %v1133
        %v1142 = vadd.f32 %v1055, %v1134
        %v1143 = vadd.f32 %v1056, %v1135
        %v1144 = vadd.f32 %v1057, %v1136
        %v1145 = vadd.f32 %v1058, %v1137
        %1146 = vrot.lane.b32.xlu0 %v441, 111
        %v1147 = vpop.permute.xlu0 %1146
        %1148 = vrot.lane.b32.xlu0 %v443, 111
        %v1149 = vpop.permute.xlu0 %1148
        %1150 = vrot.lane.b32.xlu0 %v445, 111
        %v1151 = vpop.permute.xlu0 %1150
        %1152 = vrot.lane.b32.xlu0 %v447, 111
        %v1153 = vpop.permute.xlu0 %1152
        %1154 = vrot.lane.b32.xlu0 %v442, 111
        %v1155 = vpop.permute.xlu0 %1154
        %1156 = vrot.lane.b32.xlu0 %v444, 111
        %v1157 = vpop.permute.xlu0 %1156
        %1158 = vrot.lane.b32.xlu0 %v446, 111
        %v1159 = vpop.permute.xlu0 %1158
        %1160 = vrot.lane.b32.xlu0 %v448, 111
        %v1161 = vpop.permute.xlu0 %1160
        %vm1162 = vcmp.lt.s32.totalorder %v504, 111
        %v1163 = vsel %vm1162, %v1147, %v1155
        %v1164 = vsel %vm1162, %v1149, %v1157
        %v1165 = vsel %vm1162, %v1151, %v1159
        %v1166 = vsel %vm1162, %v1153, %v1161
        %v1167 = vsel %vm1162, %v1155, %v1147
        %v1168 = vsel %vm1162, %v1157, %v1149
        %v1169 = vsel %vm1162, %v1159, %v1151
        %v1170 = vsel %vm1162, %v1161, %v1153
        %1172 = vset.pattern.permute.xlu0 0
        %1173 = vperm.xlu0 %1172, %v483
        %v1174 = vpop.permute.xlu0 %1173
        %1177 = vset.pattern.permute.xlu0 0
        %1178 = vperm.xlu0 %1177, %v484
        %v1179 = vpop.permute.xlu0 %1178
        %1182 = vset.pattern.permute.xlu0 0
        %1183 = vperm.xlu0 %1182, %v485
        %v1184 = vpop.permute.xlu0 %1183
        %1187 = vset.pattern.permute.xlu0 0
        %1188 = vperm.xlu0 %1187, %v486
        %v1189 = vpop.permute.xlu0 %1188
        %v1191 = vmul.f32 %v1163, %v1174
        %v1192 = vmul.f32 %v1167, %v1174
        %v1193 = vmul.f32 %v1164, %v1179
        %v1194 = vmul.f32 %v1168, %v1179
        %v1195 = vmul.f32 %v1165, %v1184
        %v1196 = vmul.f32 %v1169, %v1184
        %v1197 = vmul.f32 %v1166, %v1189
        %v1198 = vmul.f32 %v1170, %v1189
        %v1199 = vlaneseq
        %v1200 = vshrl.u32 %v1199, 7
        %v1201 = vsub.s32 2, %v1200
        %v1202 = vrot.slane %v542, %v1201
        %v1203 = vlaneseq
        %v1204 = vshrl.u32 %v1203, 7
        %v1205 = vsub.s32 6, %v1204
        %v1206 = vrot.slane %v542, %v1205
        %v1209 = vlaneseq
        %v1210 = vshrl.u32 %v1209, 7
        %v1211 = vsub.s32 2, %v1210
        %v1212 = vrot.slane %v1202, %v1211
        %v1213 = vlaneseq
        %v1214 = vshrl.u32 %v1213, 7
        %v1215 = vsub.s32 2, %v1214
        %v1216 = vrot.slane %v1206, %v1215
        %v1217 = vmul.f32 %v1191, %v1212
        %v1218 = vmul.f32 %v1192, %v1216
        %v1219 = vmul.f32 %v1193, %v1212
        %v1220 = vmul.f32 %v1194, %v1216
        %v1221 = vmul.f32 %v1195, %v1212
        %v1222 = vmul.f32 %v1196, %v1216
        %v1223 = vmul.f32 %v1197, %v1212
        %v1224 = vmul.f32 %v1198, %v1216
        %v1225 = vadd.f32 %v1138, %v1217
        %v1226 = vadd.f32 %v1139, %v1218
        %v1227 = vadd.f32 %v1140, %v1219
        %v1228 = vadd.f32 %v1141, %v1220
        %v1229 = vadd.f32 %v1142, %v1221
        %v1230 = vadd.f32 %v1143, %v1222
        %v1231 = vadd.f32 %v1144, %v1223
        %v1232 = vadd.f32 %v1145, %v1224
        %v1233 = vld [vmem:[%s4] sm:$0xff]
        %v1234 = vld [vmem:[%s4 + $0x8] sm:$0xff]
        %v1235 = vld [vmem:[%s4 + $0x10] sm:$0xff]
        %v1236 = vld [vmem:[%s4 + $0x18] sm:$0xff]
        %1238 = vset.pattern.permute.xlu0 0
        %1239 = vperm.xlu0 %1238, %v1233
        %v1240 = vpop.permute.xlu0 %1239
        %1243 = vset.pattern.permute.xlu0 0
        %1244 = vperm.xlu0 %1243, %v1234
        %v1245 = vpop.permute.xlu0 %1244
        %1248 = vset.pattern.permute.xlu0 0
        %1249 = vperm.xlu0 %1248, %v1235
        %v1250 = vpop.permute.xlu0 %1249
        %1253 = vset.pattern.permute.xlu0 0
        %1254 = vperm.xlu0 %1253, %v1236
        %v1255 = vpop.permute.xlu0 %1254
        %v1257 = vadd.f32 %v1225, %v1240
        %v1258 = vadd.f32 %v1226, %v1240
        %v1259 = vadd.f32 %v1227, %v1245
        %v1260 = vadd.f32 %v1228, %v1245
        %v1261 = vadd.f32 %v1229, %v1250
        %v1262 = vadd.f32 %v1230, %v1250
        %v1263 = vadd.f32 %v1231, %v1255
        %v1264 = vadd.f32 %v1232, %v1255
        %v1265 = vmax.f32 %v1257, 0.0
        %v1266 = vmax.f32 %v1258, 0.0
        %v1267 = vmax.f32 %v1259, 0.0
        %v1268 = vmax.f32 %v1260, 0.0
        %v1269 = vmax.f32 %v1261, 0.0
        %v1270 = vmax.f32 %v1262, 0.0
        %v1271 = vmax.f32 %v1263, 0.0
        %v1272 = vmax.f32 %v1264, 0.0
        %v1273 = vld [vmem:[%s5] sm:$0xf]
        %v1274 = vpack.c.bf16 %v1267, %v1265
        %v1275 = vpack.c.bf16 %v1268, %v1266
        %v1276 = vpack.c.bf16 %v1271, %v1269
        %v1277 = vpack.c.bf16 %v1272, %v1270
        %v1278 = vld [vmem:[%s6] sm:$0xff]
        %1280 = vset.pattern.permute.xlu0 0
        %1281 = vperm.xlu0 %1280, %v1278
        %v1282 = vpop.permute.xlu0 %1281
        %vm1284 = vcmask 261120
        %v1286 = vsel %vm1284, %v1273, 0
        %1288 = vmatprep.subr.bf16.mxu0 %v1275
        %1289 = vmatpush1.bf16.msra.mxu0 %v1274
        %1290 = vmatprep.subr.bf16.mxu0 %v1277
        %1291 = vmatpush1.bf16.msra.mxu0 %v1276
        %1292 = vmatprep.subr.bf16.mxu0 0
        %1293 = vmatpush1.bf16.msra.mxu0 0
        %1294 = vmatprep.subr.bf16.mxu0 0
        %1295 = vmatpush1.bf16.msra.mxu0 0
        %1296 = vmatprep.subr.bf16.mxu0 0
        %1297 = vmatpush1.bf16.msra.mxu0 0
        %1298 = vmatprep.subr.bf16.mxu0 0
        %1299 = vmatpush1.bf16.msra.mxu0 0
        %1300 = vmatprep.subr.bf16.mxu0 0
        %1301 = vmatpush1.bf16.msra.mxu0 0
        %1302 = vmatprep.subr.bf16.mxu0 0
        %1303 = vmatpush1.bf16.msra.mxu0 0
        %1304 = vmatprep.subr.bf16.mxu0 0
        %1305 = vmatpush1.bf16.msra.mxu0 0
        %1306 = vmatprep.subr.bf16.mxu0 0
        %1307 = vmatpush1.bf16.msra.mxu0 0
        %1308 = vmatprep.subr.bf16.mxu0 0
        %1309 = vmatpush1.bf16.msra.mxu0 0
        %1310 = vmatprep.subr.bf16.mxu0 0
        %1311 = vmatpush1.bf16.msra.mxu0 0
        %1312 = vmatprep.subr.bf16.mxu0 0
        %1313 = vmatpush1.bf16.msra.mxu0 0
        %1314 = vmatprep.subr.bf16.mxu0 0
        %1315 = vmatpush1.bf16.msra.mxu0 0
        %1316 = vmatprep.subr.bf16.mxu0 0
        %1317 = vmatpush1.bf16.msra.mxu0 0
        %1318 = vmatprep.subr.bf16.mxu0 0
        %1319 = vmatpush1.bf16.msra.mxu0 0
        %1320 = vmatprep.mubr.bf16.mxu0 0
        %1321 = vmatmul.mubr.bf16.gmra.mrb[0].mxu0 %v1286
        %v1322 = vpop.f32.mrb[0].mxu0
        %v1323 = vadd.f32 %v1282, %v1322
        %v1324 = vpop.f32.mrb[0].mxu0
        %v1325 = vadd.f32 %v1282, %v1324
        %v1326 = vpop.f32.mrb[0].mxu0
        %v1327 = vpop.f32.mrb[0].mxu0
        %1328 = vdwg.mxu0
        %v1329 = vadd.f32 %v332, %v1323
        %v1330 = vadd.f32 %v333, %v1325
        %1331 = vst [vmem:[%s325] sm:$0xff] %v1329
        %1332 = vst [vmem:[%s325 + $0x8] sm:$0xff] %v1330
        %s1333 = sand.u32 %s225, 1
        %s1334 = scalar_lea.sflag [#allocation3], %s1333
        %s1335 = sand.u32 %s225, 1
        %s1336 = smul.addr %s1335, 16
        %s1337 = scalar_lea.vmem [#allocation2], %s1336
        // Predicated region
        $region57: #{tpu_custom_call.1} parent=55 // pred_check
          %p1338 = pneg %p235
        $region58: #{tpu_custom_call.1} parent=55 // pred_check_branch
          %1340 = sbr.rel (%p1338) target = $region60
        $region59: #{tpu_custom_call.1} parent=55 // pred_region
          %s1342 = ssub.s32 256, 256
          %1343 = vsyncadd %s1334, %s1342
          %s1344 = smul.addr %s23, 2
          %s1345 = smul.addr %s1344, 128
          %s1346 = scalar_lea.hbm %s9, %s1345
          %s1348 = sshll.u32 %s1337, 4
          %s1349 = int_to_ptr.vmem [resolvable:$true] %s1348
          %1351 = dma.vmem_to_hbm [thread:$0]  %s1349, 256, %s1346, %s1334
        $region60: #{tpu_custom_call.1} parent=55 // pred_fallthru
          _
      $region56: #{tpu_custom_call.1} parent=5 // pred_fallthru
        _
      %p1352 = scmp.le.s32.totalorder 2, %s18
      // Predicated region
      $region61: #{tpu_custom_call.1} parent=5 // pred_check
        %p1353 = pneg %p1352
      $region62: #{tpu_custom_call.1} parent=5 // pred_check_branch
        %1355 = sbr.rel (%p1353) target = $region64
      $region63: #{tpu_custom_call.1} parent=5 // pred_region
        %s1356 = ssub.s32 %s18, 2
        // Predicated region
        $region65: #{tpu_custom_call.1} parent=63 // pred_check
          %p1357 = pneg %p241
        $region66: #{tpu_custom_call.1} parent=63 // pred_check_branch
          %1359 = sbr.rel (%p1357) target = $region68
        $region67: #{tpu_custom_call.1} parent=63 // pred_region
          %s1360 = sand.u32 %s226, 1
          %s1361 = scalar_lea.sflag [#allocation3], %s1360
          %s1362 = sand.u32 %s226, 1
          %s1363 = smul.addr %s1362, 16
          %s1364 = scalar_lea.vmem [#allocation2], %s1363
          %1365 = dma.done %s1361, 256
        $region68: #{tpu_custom_call.1} parent=63 // pred_fallthru
          _
      $region64: #{tpu_custom_call.1} parent=5 // pred_fallthru
        _
    $region6: #{tpu_custom_call.1} parent=1 // loop_footer
      %s22 = sadd.s32 1, %s18
    $region7: #{tpu_custom_call.1} parent=1 // loop_footer_branch
      %17 = sbr.rel target = $region3
    $region8: #{tpu_custom_call.1} parent=1 // loop_exit
      _
    %1366 = vsyncpa [#allocation3], 1
    %s1367 = scalar_lea.sflag [#allocation3], 1
    %1368 = vsyncpa %s1367, 1

</llo_original>
